<compile_context>
chip_gen: v5e
topology: v5e:2x2
jax: 0.10.0
libtpu: 0.0.40
codegen_flags: <defaults>
</compile_context>

<pallas_src>
import jax
import jax.numpy as jnp
from jax import lax
from jax.experimental import pallas as pl
from jax.experimental.pallas import tpu as pltpu

_COMPUTE_DTYPE = jnp.bfloat16  # MXU operand dtype (accumulation stays f32)


# ---------------------------------------------------------------------------
# Weight preprocessing (plain JAX, once per call): fold the W-dimension taps,
# stride and padding of a KxK conv into per-row-tap dense matrices.
#
#   G[dh][(wi*Cin + ci), (ow*Cout + co)] = W_oihw[co, ci, dh, dw]
#        where wi = stride*ow + dw - pad   (entries outside [0, W_in) dropped)
#
# With activations stored as (rows, W*C) canvases a conv becomes
#   out_row(oh) = sum_dh  in_row(stride*oh + dh - pad) @ G[dh] + bias
# ---------------------------------------------------------------------------
def _build_width_toeplitz(w_oihw, w_in, w_out, stride, pad):
    cout, cin, kh, kw = w_oihw.shape
    wi = jnp.arange(w_in)[:, None, None]
    ow = jnp.arange(w_out)[None, :, None]
    dw = jnp.arange(kw)[None, None, :]
    mask = (wi == stride * ow + dw - pad).astype(w_oihw.dtype)      # (Win, Wout, kw)
    g = jnp.einsum("IOd,ochd->hIcOo", mask, w_oihw)                 # (kh,Win,Cin,Wout,Cout)
    return g.reshape(kh, w_in * cin, w_out * cout)


def _bias_canvas(b, w_out):
    return jnp.tile(b, w_out).reshape(1, -1).astype(jnp.float32)


# ---------------------------------------------------------------------------
# Fused encoder kernel (one grid step == one batch element).
# ---------------------------------------------------------------------------
def _make_encoder_kernel(stride, n_res_block, cdt=_COMPUTE_DTYPE):

    def mm(a, b):
        return lax.dot(a, b, preferred_element_type=jnp.float32)

    def shift(y, offset):
        # z[k] = y[k - offset] (zero outside range), via a tiny constant-matrix
        # matmul -- avoids strided / concat relayouts inside the kernel.
        r = y.shape[0]
        row = lax.broadcasted_iota(jnp.int32, (r, r), 0)
        col = lax.broadcasted_iota(jnp.int32, (r, r), 1)
        sel = jnp.where(col == row - offset, 1.0, 0.0).astype(y.dtype)
        return lax.dot(sel, y, preferred_element_type=jnp.float32).astype(y.dtype)

    def resblocks(x, gr1_ref, br1_ref, gr2_ref, br2_ref):
        for i in range(n_res_block):
            h = jnp.maximum(x, 0.0).astype(cdt)                     # pre-ReLU
            h = (mm(shift(h, 1), gr1_ref[i, 0, :, :])               # 3x3 conv
                 + mm(h, gr1_ref[i, 1, :, :])
                 + mm(shift(h, -1), gr1_ref[i, 2, :, :])
                 + br1_ref[i, :, :])
            h = jnp.maximum(h, 0.0).astype(cdt)                     # mid ReLU
            x = x + mm(h, gr2_ref[i, 0, :, :]) + br2_ref[i, :, :]   # 1x1 conv + skip
        return x

    if stride == 4:
        def kernel(q_ref, g1_ref, b1_ref, g2_ref, b2_ref, g3_ref, b3_ref, *rest):
            if n_res_block > 0:
                gr1_ref, br1_ref, gr2_ref, br2_ref, o_ref = rest
            else:
                (o_ref,) = rest
            ho = o_ref.shape[1]                                     # H // 4
            # Input row phases: q[k][j] = padded_input_row(4*j + k), f32.
            q = [q_ref[0, k, :, :] for k in range(4)]
            lo = [p[0:ho, :].astype(cdt) for p in q]                # phase rows 0..ho-1
            hi = [p[1:ho + 1, :].astype(cdt) for p in q]            # phase rows 1..ho
            b1 = b1_ref[:, :]
            # conv1: 4x4 stride-2, evaluated separately for even/odd output rows.
            a1e = (mm(lo[0], g1_ref[0, :, :]) + mm(lo[1], g1_ref[1, :, :])
                   + mm(lo[2], g1_ref[2, :, :]) + mm(lo[3], g1_ref[3, :, :]) + b1)
            a1o = (mm(lo[2], g1_ref[0, :, :]) + mm(lo[3], g1_ref[1, :, :])
                   + mm(hi[0], g1_ref[2, :, :]) + mm(hi[1], g1_ref[3, :, :]) + b1)
            a1e = jnp.maximum(a1e, 0.0).astype(cdt)
            a1o = jnp.maximum(a1o, 0.0).astype(cdt)
            # conv2: 4x4 stride-2, consumed directly from the parity-split rows.
            a2 = (mm(shift(a1o, 1), g2_ref[0, :, :]) + mm(a1e, g2_ref[1, :, :])
                  + mm(a1o, g2_ref[2, :, :]) + mm(shift(a1e, -1), g2_ref[3, :, :])
                  + b2_ref[:, :])
            a2 = jnp.maximum(a2, 0.0).astype(cdt)
            # conv3: 3x3 stride-1.
            x = (mm(shift(a2, 1), g3_ref[0, :, :]) + mm(a2, g3_ref[1, :, :])
                 + mm(shift(a2, -1), g3_ref[2, :, :]) + b3_ref[:, :])
            if n_res_block > 0:
                x = resblocks(x, gr1_ref, br1_ref, gr2_ref, br2_ref)
            o_ref[0, :, :] = jnp.maximum(x, 0.0).astype(o_ref.dtype)
        return kernel

    def kernel(q_ref, g1_ref, b1_ref, g2_ref, b2_ref, *rest):       # stride == 2
        if n_res_block > 0:
            gr1_ref, br1_ref, gr2_ref, br2_ref, o_ref = rest
        else:
            (o_ref,) = rest
        ho = o_ref.shape[1]                                         # H // 2
        ph_e = q_ref[0, 0, :, :]                                    # even padded rows
        ph_o = q_ref[0, 1, :, :]                                    # odd padded rows
        e0 = ph_e[0:ho, :].astype(cdt)
        e1 = ph_e[1:ho + 1, :].astype(cdt)
        o0 = ph_o[0:ho, :].astype(cdt)
        o1 = ph_o[1:ho + 1, :].astype(cdt)
        # conv1: 4x4 stride-2.
        a1 = (mm(e0, g1_ref[0, :, :]) + mm(o0, g1_ref[1, :, :])
              + mm(e1, g1_ref[2, :, :]) + mm(o1, g1_ref[3, :, :]) + b1_ref[:, :])
        a1 = jnp.maximum(a1, 0.0).astype(cdt)
        # conv2: 3x3 stride-1 (no ReLU after it, per the torch module).
        x = (mm(shift(a1, 1), g2_ref[0, :, :]) + mm(a1, g2_ref[1, :, :])
             + mm(shift(a1, -1), g2_ref[2, :, :]) + b2_ref[:, :])
        if n_res_block > 0:
            x = resblocks(x, gr1_ref, br1_ref, gr2_ref, br2_ref)
        o_ref[0, :, :] = jnp.maximum(x, 0.0).astype(o_ref.dtype)
    return kernel


# ---------------------------------------------------------------------------
# Wrapper: weight/bias preprocessing + single fused pallas_call.
# ---------------------------------------------------------------------------
def encoder_forward(x_nchw, params, stride, n_res_block):
    if stride not in (2, 4):
        raise ValueError("stride must be 2 or 4")
    n, cin, h, w = x_nchw.shape
    assert h % stride == 0 and w % stride == 0
    channel = params["c2_w"].shape[0]
    cdt = _COMPUTE_DTYPE

    # NCHW -> NHWC -> (N, H, W*C) canvases (W-major, C-minor columns).
    x2 = jnp.transpose(x_nchw, (0, 2, 3, 1)).reshape(n, h, w * cin).astype(jnp.float32)

    # Pre-split padded input rows into `stride` phases so the strided convs
    # become plain shifted matmuls in the kernel (pure re-layout, no expansion).
    pad_hi = 3 if stride == 4 else 1
    xpad = jnp.pad(x2, ((0, 0), (1, pad_hi), (0, 0)))
    rpp = xpad.shape[1] // stride                                   # rows per phase
    q = xpad.reshape(n, rpp, stride, w * cin).transpose(0, 2, 1, 3)  # (N, stride, rpp, W*Cin)

    if stride == 4:
        w1, w2 = w // 2, w // 4
        h_out, w_out = h // 4, w // 4
        main = [
            _build_width_toeplitz(params["c1_w"], w, w1, 2, 1).astype(cdt),
            _bias_canvas(params["c1_b"], w1),
            _build_width_toeplitz(params["c2_w"], w1, w2, 2, 1).astype(cdt),
            _bias_canvas(params["c2_b"], w2),
            _build_width_toeplitz(params["c3_w"], w2, w2, 1, 1).astype(cdt),
            _bias_canvas(params["c3_b"], w2),
        ]
        w_res = w2
    else:
        w1 = w // 2
        h_out, w_out = h // 2, w // 2
        main = [
            _build_width_toeplitz(params["c1_w"], w, w1, 2, 1).astype(cdt),
            _bias_canvas(params["c1_b"], w1),
            _build_width_toeplitz(params["c2_w"], w1, w1, 1, 1).astype(cdt),
            _bias_canvas(params["c2_b"], w1),
        ]
        w_res = w1

    res = []
    if n_res_block > 0:
        res = [
            jnp.stack([_build_width_toeplitz(params[f"r{i}_w1"], w_res, w_res, 1, 1)
                       for i in range(n_res_block)]).astype(cdt),
            jnp.stack([_bias_canvas(params[f"r{i}_b1"], w_res)
                       for i in range(n_res_block)]),
            jnp.stack([_build_width_toeplitz(params[f"r{i}_w2"], w_res, w_res, 1, 0)
                       for i in range(n_res_block)]).astype(cdt),
            jnp.stack([_bias_canvas(params[f"r{i}_b2"], w_res)
                       for i in range(n_res_block)]),
        ]

    args = [q] + main + res

    def resident(a):  # whole array VMEM-resident (constant index_map -> loaded once)
        nd = a.ndim
        return pl.BlockSpec(a.shape, lambda b, _n=nd: (0,) * _n)

    in_specs = [pl.BlockSpec((1,) + q.shape[1:], lambda b: (b, 0, 0, 0))]
    in_specs += [resident(a) for a in main + res]

    out_cols = w_out * channel                                      # lane-dense output
    kernel = _make_encoder_kernel(stride, n_res_block)
    y = pl.pallas_call(
        kernel,
        out_shape=jax.ShapeDtypeStruct((n, h_out, out_cols), jnp.float32),
        grid=(n,),
        in_specs=in_specs,
        out_specs=pl.BlockSpec((1, h_out, out_cols), lambda b: (b, 0, 0)),
        compiler_params=pltpu.CompilerParams(dimension_semantics=("parallel",)),
    )(*args)
    return y.reshape(n, h_out, w_out, channel).transpose(0, 3, 1, 2)


# ---------------------------------------------------------------------------
# Pure-JAX reference (lax.conv, f32) for correctness checking.
# ---------------------------------------------------------------------------
def _ref_conv(x_nhwc, w_oihw, b, stride, pad):
    w_hwio = jnp.transpose(w_oihw, (2, 3, 1, 0))
    y = lax.conv_general_dilated(x_nhwc, w_hwio, (stride, stride),
                                 [(pad, pad), (pad, pad)],
                                 dimension_numbers=("NHWC", "HWIO", "NHWC"))
    return y + b.reshape(1, 1, 1, -1)


def ref_encoder_forward(x_nchw, params, stride, n_res_block):
    x = jnp.transpose(x_nchw, (0, 2, 3, 1))
    if stride == 4:
        x = jax.nn.relu(_ref_conv(x, params["c1_w"], params["c1_b"], 2, 1))
        x = jax.nn.relu(_ref_conv(x, params["c2_w"], params["c2_b"], 2, 1))
        x = _ref_conv(x, params["c3_w"], params["c3_b"], 1, 1)
    else:
        x = jax.nn.relu(_ref_conv(x, params["c1_w"], params["c1_b"], 2, 1))
        x = _ref_conv(x, params["c2_w"], params["c2_b"], 1, 1)
    for i in range(n_res_block):
        h = jax.nn.relu(x)
        h = jax.nn.relu(_ref_conv(h, params[f"r{i}_w1"], params[f"r{i}_b1"], 1, 1))
        h = _ref_conv(h, params[f"r{i}_w2"], params[f"r{i}_b2"], 1, 0)
        x = x + h
    return jnp.transpose(jax.nn.relu(x), (0, 3, 1, 2))


# ---------------------------------------------------------------------------
# Deterministic parameter init (shapes match nn.Conv2d OIHW + bias).
# ---------------------------------------------------------------------------
def init_params(key, in_channel, channel, n_res_block, n_res_channel, stride):
    def conv_init(k, cout, cin, kh, kw):
        kw_, kb_ = jax.random.split(k)
        fan_in = cin * kh * kw
        wgt = jax.random.normal(kw_, (cout, cin, kh, kw), jnp.float32) * (1.0 / fan_in) ** 0.5
        b = jax.random.normal(kb_, (cout,), jnp.float32) * 0.01
        return wgt, b

    n_main = 3 if stride == 4 else 2
    keys = jax.random.split(key, n_main + 2 * n_res_block)
    params, ki = {}, 0
    params["c1_w"], params["c1_b"] = conv_init(keys[ki], channel // 2, in_channel, 4, 4); ki += 1
    if stride == 4:
        params["c2_w"], params["c2_b"] = conv_init(keys[ki], channel, channel // 2, 4, 4); ki += 1
        params["c3_w"], params["c3_b"] = conv_init(keys[ki], channel, channel, 3, 3); ki += 1
    else:
        params["c2_w"], params["c2_b"] = conv_init(keys[ki], channel, channel // 2, 3, 3); ki += 1
    for i in range(n_res_block):
        params[f"r{i}_w1"], params[f"r{i}_b1"] = conv_init(keys[ki], n_res_channel, channel, 3, 3); ki += 1
        params[f"r{i}_w2"], params[f"r{i}_b2"] = conv_init(keys[ki], channel, n_res_channel, 1, 1); ki += 1
    return params


if __name__ == "__main__":
    # Encoder(in_channel=4, channel=32, n_res_block=2, n_res_channel=8, stride=4/2)
    in_channel, channel, n_res_block, n_res_channel = 4, 32, 2, 8

    root = jax.random.PRNGKey(0)
    k_x, k_p4, k_p2 = jax.random.split(root, 3)
    x = jax.random.normal(k_x, (2, in_channel, 16, 16), jnp.float32)  # NCHW input

    enc = jax.jit(encoder_forward, static_argnums=(2, 3))

    # --- stride == 4 variant -------------------------------------------------
    p4 = init_params(k_p4, in_channel, channel, n_res_block, n_res_channel, stride=4)
    out4 = jax.block_until_ready(enc(x, p4, 4, n_res_block))
    ref4 = jax.block_until_ready(ref_encoder_forward(x, p4, 4, n_res_block))
    assert out4.shape == (2, channel, 4, 4), out4.shape
    err4 = float(jnp.max(jnp.abs(out4 - ref4)))
    assert jnp.allclose(out4, ref4, atol=3e-2, rtol=3e-2), f"stride4 max err {err4}"

    # --- stride == 2 variant -------------------------------------------------
    p2 = init_params(k_p2, in_channel, channel, n_res_block, n_res_channel, stride=2)
    out2 = jax.block_until_ready(enc(x, p2, 2, n_res_block))
    ref2 = jax.block_until_ready(ref_encoder_forward(x, p2, 2, n_res_block))
    assert out2.shape == (2, channel, 8, 8), out2.shape
    err2 = float(jnp.max(jnp.abs(out2 - ref2)))
    assert jnp.allclose(out2, ref2, atol=3e-2, rtol=3e-2), f"stride2 max err {err2}"

    print("KERNEL_OK")
</pallas_src>

<mosaic_0001>
module attributes {stable_mosaic.version = 11 : i64} {
  func.func @kernel(%arg0: i32, %arg1: memref<1x4x5x64xf32, #tpu.memory_space<vmem>>, %arg2: memref<4x64x128xbf16, #tpu.memory_space<vmem>>, %arg3: memref<1x128xf32, #tpu.memory_space<vmem>>, %arg4: memref<4x128x128xbf16, #tpu.memory_space<vmem>>, %arg5: memref<1x128xf32, #tpu.memory_space<vmem>>, %arg6: memref<3x128x128xbf16, #tpu.memory_space<vmem>>, %arg7: memref<1x128xf32, #tpu.memory_space<vmem>>, %arg8: memref<2x3x128x32xbf16, #tpu.memory_space<vmem>>, %arg9: memref<2x1x32xf32, #tpu.memory_space<vmem>>, %arg10: memref<2x1x32x128xbf16, #tpu.memory_space<vmem>>, %arg11: memref<2x1x128xf32, #tpu.memory_space<vmem>>, %arg12: memref<1x4x128xf32, #tpu.memory_space<vmem>>) attributes {dimension_semantics = [#tpu.dimension_semantics<parallel>], iteration_bounds = array<i64: 2>, scalar_prefetch = 0 : i64, scratch_operands = 0 : i64, tpu.core_type = #tpu.core_type<tc>, window_params = [{transform_indices = @transform_0, window_bounds = array<i64: 1, 4, 5, 64>}, {pipeline_mode = #tpu.pipeline_mode<synchronous>, transform_indices = @transform_1, window_bounds = array<i64: 4, 64, 128>}, {pipeline_mode = #tpu.pipeline_mode<synchronous>, transform_indices = @transform_2, window_bounds = array<i64: 1, 128>}, {pipeline_mode = #tpu.pipeline_mode<synchronous>, transform_indices = @transform_3, window_bounds = array<i64: 4, 128, 128>}, {pipeline_mode = #tpu.pipeline_mode<synchronous>, transform_indices = @transform_4, window_bounds = array<i64: 1, 128>}, {pipeline_mode = #tpu.pipeline_mode<synchronous>, transform_indices = @transform_5, window_bounds = array<i64: 3, 128, 128>}, {pipeline_mode = #tpu.pipeline_mode<synchronous>, transform_indices = @transform_6, window_bounds = array<i64: 1, 128>}, {pipeline_mode = #tpu.pipeline_mode<synchronous>, transform_indices = @transform_7, window_bounds = array<i64: 2, 3, 128, 32>}, {pipeline_mode = #tpu.pipeline_mode<synchronous>, transform_indices = @transform_8, window_bounds = array<i64: 2, 1, 32>}, {pipeline_mode = #tpu.pipeline_mode<synchronous>, transform_indices = @transform_9, window_bounds = array<i64: 2, 1, 32, 128>}, {pipeline_mode = #tpu.pipeline_mode<synchronous>, transform_indices = @transform_10, window_bounds = array<i64: 2, 1, 128>}, {transform_indices = @transform_11, window_bounds = array<i64: 1, 4, 128>}]} {
    %c0 = arith.constant 0 : index
    %c0_0 = arith.constant 0 : index
    %c0_1 = arith.constant 0 : index
    %c0_2 = arith.constant 0 : index
    %0 = vector.load %arg1[%c0, %c0_0, %c0_1, %c0_2] : memref<1x4x5x64xf32, #tpu.memory_space<vmem>>, vector<1x1x5x64xf32>
    %1 = vector.shape_cast %0 : vector<1x1x5x64xf32> to vector<5x64xf32>
    %c0_3 = arith.constant 0 : index
    %c1 = arith.constant 1 : index
    %c0_4 = arith.constant 0 : index
    %c0_5 = arith.constant 0 : index
    %2 = vector.load %arg1[%c0_3, %c1, %c0_4, %c0_5] : memref<1x4x5x64xf32, #tpu.memory_space<vmem>>, vector<1x1x5x64xf32>
    %3 = vector.shape_cast %2 : vector<1x1x5x64xf32> to vector<5x64xf32>
    %c0_6 = arith.constant 0 : index
    %c2 = arith.constant 2 : index
    %c0_7 = arith.constant 0 : index
    %c0_8 = arith.constant 0 : index
    %4 = vector.load %arg1[%c0_6, %c2, %c0_7, %c0_8] : memref<1x4x5x64xf32, #tpu.memory_space<vmem>>, vector<1x1x5x64xf32>
    %5 = vector.shape_cast %4 : vector<1x1x5x64xf32> to vector<5x64xf32>
    %c0_9 = arith.constant 0 : index
    %c3 = arith.constant 3 : index
    %c0_10 = arith.constant 0 : index
    %c0_11 = arith.constant 0 : index
    %6 = vector.load %arg1[%c0_9, %c3, %c0_10, %c0_11] : memref<1x4x5x64xf32, #tpu.memory_space<vmem>>, vector<1x1x5x64xf32>
    %7 = vector.shape_cast %6 : vector<1x1x5x64xf32> to vector<5x64xf32>
    %8 = vector.extract_strided_slice %1 {offsets = [0, 0], sizes = [4, 64], strides = [1, 1]} : vector<5x64xf32> to vector<4x64xf32>
    %9 = arith.truncf %8 : vector<4x64xf32> to vector<4x64xbf16>
    %10 = vector.extract_strided_slice %3 {offsets = [0, 0], sizes = [4, 64], strides = [1, 1]} : vector<5x64xf32> to vector<4x64xf32>
    %11 = arith.truncf %10 : vector<4x64xf32> to vector<4x64xbf16>
    %12 = vector.extract_strided_slice %5 {offsets = [0, 0], sizes = [4, 64], strides = [1, 1]} : vector<5x64xf32> to vector<4x64xf32>
    %13 = arith.truncf %12 : vector<4x64xf32> to vector<4x64xbf16>
    %14 = vector.extract_strided_slice %7 {offsets = [0, 0], sizes = [4, 64], strides = [1, 1]} : vector<5x64xf32> to vector<4x64xf32>
    %15 = arith.truncf %14 : vector<4x64xf32> to vector<4x64xbf16>
    %16 = vector.extract_strided_slice %1 {offsets = [1, 0], sizes = [4, 64], strides = [1, 1]} : vector<5x64xf32> to vector<4x64xf32>
    %17 = arith.truncf %16 : vector<4x64xf32> to vector<4x64xbf16>
    %18 = vector.extract_strided_slice %3 {offsets = [1, 0], sizes = [4, 64], strides = [1, 1]} : vector<5x64xf32> to vector<4x64xf32>
    %19 = arith.truncf %18 : vector<4x64xf32> to vector<4x64xbf16>
    %c0_12 = arith.constant 0 : index
    %c0_13 = arith.constant 0 : index
    %20 = vector.load %arg3[%c0_12, %c0_13] : memref<1x128xf32, #tpu.memory_space<vmem>>, vector<1x128xf32>
    %c0_14 = arith.constant 0 : index
    %c0_15 = arith.constant 0 : index
    %c0_16 = arith.constant 0 : index
    %21 = vector.load %arg2[%c0_14, %c0_15, %c0_16] : memref<4x64x128xbf16, #tpu.memory_space<vmem>>, vector<1x64x128xbf16>
    %22 = vector.shape_cast %21 : vector<1x64x128xbf16> to vector<64x128xbf16>
    %cst = arith.constant dense<0.000000e+00> : vector<4x128xf32>
    %23 = tpu.matmul %9, %22, %cst {dimension_numbers = #tpu.dot_dimension_numbers<[1], [0], [0], [1], [0, 0, 1, 1], [], []>} : vector<4x64xbf16>, vector<64x128xbf16>, vector<4x128xf32> -> vector<4x128xf32>
    %c1_17 = arith.constant 1 : index
    %c0_18 = arith.constant 0 : index
    %c0_19 = arith.constant 0 : index
    %24 = vector.load %arg2[%c1_17, %c0_18, %c0_19] : memref<4x64x128xbf16, #tpu.memory_space<vmem>>, vector<1x64x128xbf16>
    %25 = vector.shape_cast %24 : vector<1x64x128xbf16> to vector<64x128xbf16>
    %cst_20 = arith.constant dense<0.000000e+00> : vector<4x128xf32>
    %26 = tpu.matmul %11, %25, %cst_20 {dimension_numbers = #tpu.dot_dimension_numbers<[1], [0], [0], [1], [0, 0, 1, 1], [], []>} : vector<4x64xbf16>, vector<64x128xbf16>, vector<4x128xf32> -> vector<4x128xf32>
    %27 = arith.addf %23, %26 : vector<4x128xf32>
    %c2_21 = arith.constant 2 : index
    %c0_22 = arith.constant 0 : index
    %c0_23 = arith.constant 0 : index
    %28 = vector.load %arg2[%c2_21, %c0_22, %c0_23] : memref<4x64x128xbf16, #tpu.memory_space<vmem>>, vector<1x64x128xbf16>
    %29 = vector.shape_cast %28 : vector<1x64x128xbf16> to vector<64x128xbf16>
    %cst_24 = arith.constant dense<0.000000e+00> : vector<4x128xf32>
    %30 = tpu.matmul %13, %29, %cst_24 {dimension_numbers = #tpu.dot_dimension_numbers<[1], [0], [0], [1], [0, 0, 1, 1], [], []>} : vector<4x64xbf16>, vector<64x128xbf16>, vector<4x128xf32> -> vector<4x128xf32>
    %31 = arith.addf %27, %30 : vector<4x128xf32>
    %c3_25 = arith.constant 3 : index
    %c0_26 = arith.constant 0 : index
    %c0_27 = arith.constant 0 : index
    %32 = vector.load %arg2[%c3_25, %c0_26, %c0_27] : memref<4x64x128xbf16, #tpu.memory_space<vmem>>, vector<1x64x128xbf16>
    %33 = vector.shape_cast %32 : vector<1x64x128xbf16> to vector<64x128xbf16>
    %cst_28 = arith.constant dense<0.000000e+00> : vector<4x128xf32>
    %34 = tpu.matmul %15, %33, %cst_28 {dimension_numbers = #tpu.dot_dimension_numbers<[1], [0], [0], [1], [0, 0, 1, 1], [], []>} : vector<4x64xbf16>, vector<64x128xbf16>, vector<4x128xf32> -> vector<4x128xf32>
    %35 = arith.addf %31, %34 : vector<4x128xf32>
    %36 = vector.broadcast %20 : vector<1x128xf32> to vector<4x128xf32>
    %37 = arith.addf %35, %36 : vector<4x128xf32>
    %c0_29 = arith.constant 0 : index
    %c0_30 = arith.constant 0 : index
    %c0_31 = arith.constant 0 : index
    %38 = vector.load %arg2[%c0_29, %c0_30, %c0_31] : memref<4x64x128xbf16, #tpu.memory_space<vmem>>, vector<1x64x128xbf16>
    %39 = vector.shape_cast %38 : vector<1x64x128xbf16> to vector<64x128xbf16>
    %cst_32 = arith.constant dense<0.000000e+00> : vector<4x128xf32>
    %40 = tpu.matmul %13, %39, %cst_32 {dimension_numbers = #tpu.dot_dimension_numbers<[1], [0], [0], [1], [0, 0, 1, 1], [], []>} : vector<4x64xbf16>, vector<64x128xbf16>, vector<4x128xf32> -> vector<4x128xf32>
    %c1_33 = arith.constant 1 : index
    %c0_34 = arith.constant 0 : index
    %c0_35 = arith.constant 0 : index
    %41 = vector.load %arg2[%c1_33, %c0_34, %c0_35] : memref<4x64x128xbf16, #tpu.memory_space<vmem>>, vector<1x64x128xbf16>
    %42 = vector.shape_cast %41 : vector<1x64x128xbf16> to vector<64x128xbf16>
    %cst_36 = arith.constant dense<0.000000e+00> : vector<4x128xf32>
    %43 = tpu.matmul %15, %42, %cst_36 {dimension_numbers = #tpu.dot_dimension_numbers<[1], [0], [0], [1], [0, 0, 1, 1], [], []>} : vector<4x64xbf16>, vector<64x128xbf16>, vector<4x128xf32> -> vector<4x128xf32>
    %44 = arith.addf %40, %43 : vector<4x128xf32>
    %c2_37 = arith.constant 2 : index
    %c0_38 = arith.constant 0 : index
    %c0_39 = arith.constant 0 : index
    %45 = vector.load %arg2[%c2_37, %c0_38, %c0_39] : memref<4x64x128xbf16, #tpu.memory_space<vmem>>, vector<1x64x128xbf16>
    %46 = vector.shape_cast %45 : vector<1x64x128xbf16> to vector<64x128xbf16>
    %cst_40 = arith.constant dense<0.000000e+00> : vector<4x128xf32>
    %47 = tpu.matmul %17, %46, %cst_40 {dimension_numbers = #tpu.dot_dimension_numbers<[1], [0], [0], [1], [0, 0, 1, 1], [], []>} : vector<4x64xbf16>, vector<64x128xbf16>, vector<4x128xf32> -> vector<4x128xf32>
    %48 = arith.addf %44, %47 : vector<4x128xf32>
    %c3_41 = arith.constant 3 : index
    %c0_42 = arith.constant 0 : index
    %c0_43 = arith.constant 0 : index
    %49 = vector.load %arg2[%c3_41, %c0_42, %c0_43] : memref<4x64x128xbf16, #tpu.memory_space<vmem>>, vector<1x64x128xbf16>
    %50 = vector.shape_cast %49 : vector<1x64x128xbf16> to vector<64x128xbf16>
    %cst_44 = arith.constant dense<0.000000e+00> : vector<4x128xf32>
    %51 = tpu.matmul %19, %50, %cst_44 {dimension_numbers = #tpu.dot_dimension_numbers<[1], [0], [0], [1], [0, 0, 1, 1], [], []>} : vector<4x64xbf16>, vector<64x128xbf16>, vector<4x128xf32> -> vector<4x128xf32>
    %52 = arith.addf %48, %51 : vector<4x128xf32>
    %53 = vector.broadcast %20 : vector<1x128xf32> to vector<4x128xf32>
    %54 = arith.addf %52, %53 : vector<4x128xf32>
    %cst_45 = arith.constant 0.000000e+00 : f32
    %55 = vector.broadcast %cst_45 : f32 to vector<4x128xf32>
    %56 = arith.maximumf %37, %55 : vector<4x128xf32>
    %57 = arith.truncf %56 : vector<4x128xf32> to vector<4x128xbf16>
    %cst_46 = arith.constant 0.000000e+00 : f32
    %58 = vector.broadcast %cst_46 : f32 to vector<4x128xf32>
    %59 = arith.maximumf %54, %58 : vector<4x128xf32>
    %60 = arith.truncf %59 : vector<4x128xf32> to vector<4x128xbf16>
    %61 = tpu.iota {dimensions = array<i32: 0>} : vector<4x4xi32>
    %62 = tpu.iota {dimensions = array<i32: 1>} : vector<4x4xi32>
    %c1_i32 = arith.constant 1 : i32
    %63 = vector.broadcast %c1_i32 : i32 to vector<4x4xi32>
    %64 = arith.subi %61, %63 : vector<4x4xi32>
    %65 = arith.cmpi eq, %62, %64 : vector<4x4xi32>
    %cst_47 = arith.constant 1.000000e+00 : f32
    %cst_48 = arith.constant 0.000000e+00 : f32
    %66 = vector.broadcast %cst_47 : f32 to vector<4x4xf32>
    %67 = vector.broadcast %cst_48 : f32 to vector<4x4xf32>
    %68 = arith.select %65, %66, %67 : vector<4x4xi1>, vector<4x4xf32>
    %69 = arith.truncf %68 : vector<4x4xf32> to vector<4x4xbf16>
    %cst_49 = arith.constant dense<0.000000e+00> : vector<4x128xf32>
    %70 = tpu.matmul %69, %60, %cst_49 {dimension_numbers = #tpu.dot_dimension_numbers<[1], [0], [0], [1], [0, 0, 1, 1], [], []>} : vector<4x4xbf16>, vector<4x128xbf16>, vector<4x128xf32> -> vector<4x128xf32>
    %71 = arith.truncf %70 : vector<4x128xf32> to vector<4x128xbf16>
    %c0_50 = arith.constant 0 : index
    %c0_51 = arith.constant 0 : index
    %c0_52 = arith.constant 0 : index
    %72 = vector.load %arg4[%c0_50, %c0_51, %c0_52] : memref<4x128x128xbf16, #tpu.memory_space<vmem>>, vector<1x128x128xbf16>
    %73 = vector.shape_cast %72 : vector<1x128x128xbf16> to vector<128x128xbf16>
    %cst_53 = arith.constant dense<0.000000e+00> : vector<4x128xf32>
    %74 = tpu.matmul %71, %73, %cst_53 {dimension_numbers = #tpu.dot_dimension_numbers<[1], [0], [0], [1], [0, 0, 1, 1], [], []>} : vector<4x128xbf16>, vector<128x128xbf16>, vector<4x128xf32> -> vector<4x128xf32>
    %c1_54 = arith.constant 1 : index
    %c0_55 = arith.constant 0 : index
    %c0_56 = arith.constant 0 : index
    %75 = vector.load %arg4[%c1_54, %c0_55, %c0_56] : memref<4x128x128xbf16, #tpu.memory_space<vmem>>, vector<1x128x128xbf16>
    %76 = vector.shape_cast %75 : vector<1x128x128xbf16> to vector<128x128xbf16>
    %cst_57 = arith.constant dense<0.000000e+00> : vector<4x128xf32>
    %77 = tpu.matmul %57, %76, %cst_57 {dimension_numbers = #tpu.dot_dimension_numbers<[1], [0], [0], [1], [0, 0, 1, 1], [], []>} : vector<4x128xbf16>, vector<128x128xbf16>, vector<4x128xf32> -> vector<4x128xf32>
    %78 = arith.addf %74, %77 : vector<4x128xf32>
    %c2_58 = arith.constant 2 : index
    %c0_59 = arith.constant 0 : index
    %c0_60 = arith.constant 0 : index
    %79 = vector.load %arg4[%c2_58, %c0_59, %c0_60] : memref<4x128x128xbf16, #tpu.memory_space<vmem>>, vector<1x128x128xbf16>
    %80 = vector.shape_cast %79 : vector<1x128x128xbf16> to vector<128x128xbf16>
    %cst_61 = arith.constant dense<0.000000e+00> : vector<4x128xf32>
    %81 = tpu.matmul %60, %80, %cst_61 {dimension_numbers = #tpu.dot_dimension_numbers<[1], [0], [0], [1], [0, 0, 1, 1], [], []>} : vector<4x128xbf16>, vector<128x128xbf16>, vector<4x128xf32> -> vector<4x128xf32>
    %82 = arith.addf %78, %81 : vector<4x128xf32>
    %83 = tpu.iota {dimensions = array<i32: 0>} : vector<4x4xi32>
    %84 = tpu.iota {dimensions = array<i32: 1>} : vector<4x4xi32>
    %c-1_i32 = arith.constant -1 : i32
    %85 = vector.broadcast %c-1_i32 : i32 to vector<4x4xi32>
    %86 = arith.subi %83, %85 : vector<4x4xi32>
    %87 = arith.cmpi eq, %84, %86 : vector<4x4xi32>
    %cst_62 = arith.constant 1.000000e+00 : f32
    %cst_63 = arith.constant 0.000000e+00 : f32
    %88 = vector.broadcast %cst_62 : f32 to vector<4x4xf32>
    %89 = vector.broadcast %cst_63 : f32 to vector<4x4xf32>
    %90 = arith.select %87, %88, %89 : vector<4x4xi1>, vector<4x4xf32>
    %91 = arith.truncf %90 : vector<4x4xf32> to vector<4x4xbf16>
    %cst_64 = arith.constant dense<0.000000e+00> : vector<4x128xf32>
    %92 = tpu.matmul %91, %57, %cst_64 {dimension_numbers = #tpu.dot_dimension_numbers<[1], [0], [0], [1], [0, 0, 1, 1], [], []>} : vector<4x4xbf16>, vector<4x128xbf16>, vector<4x128xf32> -> vector<4x128xf32>
    %93 = arith.truncf %92 : vector<4x128xf32> to vector<4x128xbf16>
    %c3_65 = arith.constant 3 : index
    %c0_66 = arith.constant 0 : index
    %c0_67 = arith.constant 0 : index
    %94 = vector.load %arg4[%c3_65, %c0_66, %c0_67] : memref<4x128x128xbf16, #tpu.memory_space<vmem>>, vector<1x128x128xbf16>
    %95 = vector.shape_cast %94 : vector<1x128x128xbf16> to vector<128x128xbf16>
    %cst_68 = arith.constant dense<0.000000e+00> : vector<4x128xf32>
    %96 = tpu.matmul %93, %95, %cst_68 {dimension_numbers = #tpu.dot_dimension_numbers<[1], [0], [0], [1], [0, 0, 1, 1], [], []>} : vector<4x128xbf16>, vector<128x128xbf16>, vector<4x128xf32> -> vector<4x128xf32>
    %97 = arith.addf %82, %96 : vector<4x128xf32>
    %c0_69 = arith.constant 0 : index
    %c0_70 = arith.constant 0 : index
    %98 = vector.load %arg5[%c0_69, %c0_70] : memref<1x128xf32, #tpu.memory_space<vmem>>, vector<1x128xf32>
    %99 = vector.broadcast %98 : vector<1x128xf32> to vector<4x128xf32>
    %100 = arith.addf %97, %99 : vector<4x128xf32>
    %cst_71 = arith.constant 0.000000e+00 : f32
    %101 = vector.broadcast %cst_71 : f32 to vector<4x128xf32>
    %102 = arith.maximumf %100, %101 : vector<4x128xf32>
    %103 = arith.truncf %102 : vector<4x128xf32> to vector<4x128xbf16>
    %104 = tpu.iota {dimensions = array<i32: 0>} : vector<4x4xi32>
    %105 = tpu.iota {dimensions = array<i32: 1>} : vector<4x4xi32>
    %c1_i32_72 = arith.constant 1 : i32
    %106 = vector.broadcast %c1_i32_72 : i32 to vector<4x4xi32>
    %107 = arith.subi %104, %106 : vector<4x4xi32>
    %108 = arith.cmpi eq, %105, %107 : vector<4x4xi32>
    %cst_73 = arith.constant 1.000000e+00 : f32
    %cst_74 = arith.constant 0.000000e+00 : f32
    %109 = vector.broadcast %cst_73 : f32 to vector<4x4xf32>
    %110 = vector.broadcast %cst_74 : f32 to vector<4x4xf32>
    %111 = arith.select %108, %109, %110 : vector<4x4xi1>, vector<4x4xf32>
    %112 = arith.truncf %111 : vector<4x4xf32> to vector<4x4xbf16>
    %cst_75 = arith.constant dense<0.000000e+00> : vector<4x128xf32>
    %113 = tpu.matmul %112, %103, %cst_75 {dimension_numbers = #tpu.dot_dimension_numbers<[1], [0], [0], [1], [0, 0, 1, 1], [], []>} : vector<4x4xbf16>, vector<4x128xbf16>, vector<4x128xf32> -> vector<4x128xf32>
    %114 = arith.truncf %113 : vector<4x128xf32> to vector<4x128xbf16>
    %c0_76 = arith.constant 0 : index
    %c0_77 = arith.constant 0 : index
    %c0_78 = arith.constant 0 : index
    %115 = vector.load %arg6[%c0_76, %c0_77, %c0_78] : memref<3x128x128xbf16, #tpu.memory_space<vmem>>, vector<1x128x128xbf16>
    %116 = vector.shape_cast %115 : vector<1x128x128xbf16> to vector<128x128xbf16>
    %cst_79 = arith.constant dense<0.000000e+00> : vector<4x128xf32>
    %117 = tpu.matmul %114, %116, %cst_79 {dimension_numbers = #tpu.dot_dimension_numbers<[1], [0], [0], [1], [0, 0, 1, 1], [], []>} : vector<4x128xbf16>, vector<128x128xbf16>, vector<4x128xf32> -> vector<4x128xf32>
    %c1_80 = arith.constant 1 : index
    %c0_81 = arith.constant 0 : index
    %c0_82 = arith.constant 0 : index
    %118 = vector.load %arg6[%c1_80, %c0_81, %c0_82] : memref<3x128x128xbf16, #tpu.memory_space<vmem>>, vector<1x128x128xbf16>
    %119 = vector.shape_cast %118 : vector<1x128x128xbf16> to vector<128x128xbf16>
    %cst_83 = arith.constant dense<0.000000e+00> : vector<4x128xf32>
    %120 = tpu.matmul %103, %119, %cst_83 {dimension_numbers = #tpu.dot_dimension_numbers<[1], [0], [0], [1], [0, 0, 1, 1], [], []>} : vector<4x128xbf16>, vector<128x128xbf16>, vector<4x128xf32> -> vector<4x128xf32>
    %121 = arith.addf %117, %120 : vector<4x128xf32>
    %122 = tpu.iota {dimensions = array<i32: 0>} : vector<4x4xi32>
    %123 = tpu.iota {dimensions = array<i32: 1>} : vector<4x4xi32>
    %c-1_i32_84 = arith.constant -1 : i32
    %124 = vector.broadcast %c-1_i32_84 : i32 to vector<4x4xi32>
    %125 = arith.subi %122, %124 : vector<4x4xi32>
    %126 = arith.cmpi eq, %123, %125 : vector<4x4xi32>
    %cst_85 = arith.constant 1.000000e+00 : f32
    %cst_86 = arith.constant 0.000000e+00 : f32
    %127 = vector.broadcast %cst_85 : f32 to vector<4x4xf32>
    %128 = vector.broadcast %cst_86 : f32 to vector<4x4xf32>
    %129 = arith.select %126, %127, %128 : vector<4x4xi1>, vector<4x4xf32>
    %130 = arith.truncf %129 : vector<4x4xf32> to vector<4x4xbf16>
    %cst_87 = arith.constant dense<0.000000e+00> : vector<4x128xf32>
    %131 = tpu.matmul %130, %103, %cst_87 {dimension_numbers = #tpu.dot_dimension_numbers<[1], [0], [0], [1], [0, 0, 1, 1], [], []>} : vector<4x4xbf16>, vector<4x128xbf16>, vector<4x128xf32> -> vector<4x128xf32>
    %132 = arith.truncf %131 : vector<4x128xf32> to vector<4x128xbf16>
    %c2_88 = arith.constant 2 : index
    %c0_89 = arith.constant 0 : index
    %c0_90 = arith.constant 0 : index
    %133 = vector.load %arg6[%c2_88, %c0_89, %c0_90] : memref<3x128x128xbf16, #tpu.memory_space<vmem>>, vector<1x128x128xbf16>
    %134 = vector.shape_cast %133 : vector<1x128x128xbf16> to vector<128x128xbf16>
    %cst_91 = arith.constant dense<0.000000e+00> : vector<4x128xf32>
    %135 = tpu.matmul %132, %134, %cst_91 {dimension_numbers = #tpu.dot_dimension_numbers<[1], [0], [0], [1], [0, 0, 1, 1], [], []>} : vector<4x128xbf16>, vector<128x128xbf16>, vector<4x128xf32> -> vector<4x128xf32>
    %136 = arith.addf %121, %135 : vector<4x128xf32>
    %c0_92 = arith.constant 0 : index
    %c0_93 = arith.constant 0 : index
    %137 = vector.load %arg7[%c0_92, %c0_93] : memref<1x128xf32, #tpu.memory_space<vmem>>, vector<1x128xf32>
    %138 = vector.broadcast %137 : vector<1x128xf32> to vector<4x128xf32>
    %139 = arith.addf %136, %138 : vector<4x128xf32>
    %cst_94 = arith.constant 0.000000e+00 : f32
    %140 = vector.broadcast %cst_94 : f32 to vector<4x128xf32>
    %141 = arith.maximumf %139, %140 : vector<4x128xf32>
    %142 = arith.truncf %141 : vector<4x128xf32> to vector<4x128xbf16>
    %143 = tpu.iota {dimensions = array<i32: 0>} : vector<4x4xi32>
    %144 = tpu.iota {dimensions = array<i32: 1>} : vector<4x4xi32>
    %c1_i32_95 = arith.constant 1 : i32
    %145 = vector.broadcast %c1_i32_95 : i32 to vector<4x4xi32>
    %146 = arith.subi %143, %145 : vector<4x4xi32>
    %147 = arith.cmpi eq, %144, %146 : vector<4x4xi32>
    %cst_96 = arith.constant 1.000000e+00 : f32
    %cst_97 = arith.constant 0.000000e+00 : f32
    %148 = vector.broadcast %cst_96 : f32 to vector<4x4xf32>
    %149 = vector.broadcast %cst_97 : f32 to vector<4x4xf32>
    %150 = arith.select %147, %148, %149 : vector<4x4xi1>, vector<4x4xf32>
    %151 = arith.truncf %150 : vector<4x4xf32> to vector<4x4xbf16>
    %cst_98 = arith.constant dense<0.000000e+00> : vector<4x128xf32>
    %152 = tpu.matmul %151, %142, %cst_98 {dimension_numbers = #tpu.dot_dimension_numbers<[1], [0], [0], [1], [0, 0, 1, 1], [], []>} : vector<4x4xbf16>, vector<4x128xbf16>, vector<4x128xf32> -> vector<4x128xf32>
    %153 = arith.truncf %152 : vector<4x128xf32> to vector<4x128xbf16>
    %c0_99 = arith.constant 0 : index
    %c0_100 = arith.constant 0 : index
    %c0_101 = arith.constant 0 : index
    %c0_102 = arith.constant 0 : index
    %154 = vector.load %arg8[%c0_99, %c0_100, %c0_101, %c0_102] : memref<2x3x128x32xbf16, #tpu.memory_space<vmem>>, vector<1x1x128x32xbf16>
    %155 = vector.shape_cast %154 : vector<1x1x128x32xbf16> to vector<128x32xbf16>
    %cst_103 = arith.constant dense<0.000000e+00> : vector<4x32xf32>
    %156 = tpu.matmul %153, %155, %cst_103 {dimension_numbers = #tpu.dot_dimension_numbers<[1], [0], [0], [1], [0, 0, 1, 1], [], []>} : vector<4x128xbf16>, vector<128x32xbf16>, vector<4x32xf32> -> vector<4x32xf32>
    %c0_104 = arith.constant 0 : index
    %c1_105 = arith.constant 1 : index
    %c0_106 = arith.constant 0 : index
    %c0_107 = arith.constant 0 : index
    %157 = vector.load %arg8[%c0_104, %c1_105, %c0_106, %c0_107] : memref<2x3x128x32xbf16, #tpu.memory_space<vmem>>, vector<1x1x128x32xbf16>
    %158 = vector.shape_cast %157 : vector<1x1x128x32xbf16> to vector<128x32xbf16>
    %cst_108 = arith.constant dense<0.000000e+00> : vector<4x32xf32>
    %159 = tpu.matmul %142, %158, %cst_108 {dimension_numbers = #tpu.dot_dimension_numbers<[1], [0], [0], [1], [0, 0, 1, 1], [], []>} : vector<4x128xbf16>, vector<128x32xbf16>, vector<4x32xf32> -> vector<4x32xf32>
    %160 = arith.addf %156, %159 : vector<4x32xf32>
    %161 = tpu.iota {dimensions = array<i32: 0>} : vector<4x4xi32>
    %162 = tpu.iota {dimensions = array<i32: 1>} : vector<4x4xi32>
    %c-1_i32_109 = arith.constant -1 : i32
    %163 = vector.broadcast %c-1_i32_109 : i32 to vector<4x4xi32>
    %164 = arith.subi %161, %163 : vector<4x4xi32>
    %165 = arith.cmpi eq, %162, %164 : vector<4x4xi32>
    %cst_110 = arith.constant 1.000000e+00 : f32
    %cst_111 = arith.constant 0.000000e+00 : f32
    %166 = vector.broadcast %cst_110 : f32 to vector<4x4xf32>
    %167 = vector.broadcast %cst_111 : f32 to vector<4x4xf32>
    %168 = arith.select %165, %166, %167 : vector<4x4xi1>, vector<4x4xf32>
    %169 = arith.truncf %168 : vector<4x4xf32> to vector<4x4xbf16>
    %cst_112 = arith.constant dense<0.000000e+00> : vector<4x128xf32>
    %170 = tpu.matmul %169, %142, %cst_112 {dimension_numbers = #tpu.dot_dimension_numbers<[1], [0], [0], [1], [0, 0, 1, 1], [], []>} : vector<4x4xbf16>, vector<4x128xbf16>, vector<4x128xf32> -> vector<4x128xf32>
    %171 = arith.truncf %170 : vector<4x128xf32> to vector<4x128xbf16>
    %c0_113 = arith.constant 0 : index
    %c2_114 = arith.constant 2 : index
    %c0_115 = arith.constant 0 : index
    %c0_116 = arith.constant 0 : index
    %172 = vector.load %arg8[%c0_113, %c2_114, %c0_115, %c0_116] : memref<2x3x128x32xbf16, #tpu.memory_space<vmem>>, vector<1x1x128x32xbf16>
    %173 = vector.shape_cast %172 : vector<1x1x128x32xbf16> to vector<128x32xbf16>
    %cst_117 = arith.constant dense<0.000000e+00> : vector<4x32xf32>
    %174 = tpu.matmul %171, %173, %cst_117 {dimension_numbers = #tpu.dot_dimension_numbers<[1], [0], [0], [1], [0, 0, 1, 1], [], []>} : vector<4x128xbf16>, vector<128x32xbf16>, vector<4x32xf32> -> vector<4x32xf32>
    %175 = arith.addf %160, %174 : vector<4x32xf32>
    %c0_118 = arith.constant 0 : index
    %c0_119 = arith.constant 0 : index
    %c0_120 = arith.constant 0 : index
    %176 = vector.load %arg9[%c0_118, %c0_119, %c0_120] : memref<2x1x32xf32, #tpu.memory_space<vmem>>, vector<1x1x32xf32>
    %177 = vector.shape_cast %176 : vector<1x1x32xf32> to vector<1x32xf32>
    %178 = vector.broadcast %177 : vector<1x32xf32> to vector<4x32xf32>
    %179 = arith.addf %175, %178 : vector<4x32xf32>
    %cst_121 = arith.constant 0.000000e+00 : f32
    %180 = vector.broadcast %cst_121 : f32 to vector<4x32xf32>
    %181 = arith.maximumf %179, %180 : vector<4x32xf32>
    %182 = arith.truncf %181 : vector<4x32xf32> to vector<4x32xbf16>
    %c0_122 = arith.constant 0 : index
    %c0_123 = arith.constant 0 : index
    %c0_124 = arith.constant 0 : index
    %c0_125 = arith.constant 0 : index
    %183 = vector.load %arg10[%c0_122, %c0_123, %c0_124, %c0_125] : memref<2x1x32x128xbf16, #tpu.memory_space<vmem>>, vector<1x1x32x128xbf16>
    %184 = vector.shape_cast %183 : vector<1x1x32x128xbf16> to vector<32x128xbf16>
    %cst_126 = arith.constant dense<0.000000e+00> : vector<4x128xf32>
    %185 = tpu.matmul %182, %184, %cst_126 {dimension_numbers = #tpu.dot_dimension_numbers<[1], [0], [0], [1], [0, 0, 1, 1], [], []>} : vector<4x32xbf16>, vector<32x128xbf16>, vector<4x128xf32> -> vector<4x128xf32>
    %186 = arith.addf %139, %185 : vector<4x128xf32>
    %c0_127 = arith.constant 0 : index
    %c0_128 = arith.constant 0 : index
    %c0_129 = arith.constant 0 : index
    %187 = vector.load %arg11[%c0_127, %c0_128, %c0_129] : memref<2x1x128xf32, #tpu.memory_space<vmem>>, vector<1x1x128xf32>
    %188 = vector.shape_cast %187 : vector<1x1x128xf32> to vector<1x128xf32>
    %189 = vector.broadcast %188 : vector<1x128xf32> to vector<4x128xf32>
    %190 = arith.addf %186, %189 : vector<4x128xf32>
    %cst_130 = arith.constant 0.000000e+00 : f32
    %191 = vector.broadcast %cst_130 : f32 to vector<4x128xf32>
    %192 = arith.maximumf %190, %191 : vector<4x128xf32>
    %193 = arith.truncf %192 : vector<4x128xf32> to vector<4x128xbf16>
    %194 = tpu.iota {dimensions = array<i32: 0>} : vector<4x4xi32>
    %195 = tpu.iota {dimensions = array<i32: 1>} : vector<4x4xi32>
    %c1_i32_131 = arith.constant 1 : i32
    %196 = vector.broadcast %c1_i32_131 : i32 to vector<4x4xi32>
    %197 = arith.subi %194, %196 : vector<4x4xi32>
    %198 = arith.cmpi eq, %195, %197 : vector<4x4xi32>
    %cst_132 = arith.constant 1.000000e+00 : f32
    %cst_133 = arith.constant 0.000000e+00 : f32
    %199 = vector.broadcast %cst_132 : f32 to vector<4x4xf32>
    %200 = vector.broadcast %cst_133 : f32 to vector<4x4xf32>
    %201 = arith.select %198, %199, %200 : vector<4x4xi1>, vector<4x4xf32>
    %202 = arith.truncf %201 : vector<4x4xf32> to vector<4x4xbf16>
    %cst_134 = arith.constant dense<0.000000e+00> : vector<4x128xf32>
    %203 = tpu.matmul %202, %193, %cst_134 {dimension_numbers = #tpu.dot_dimension_numbers<[1], [0], [0], [1], [0, 0, 1, 1], [], []>} : vector<4x4xbf16>, vector<4x128xbf16>, vector<4x128xf32> -> vector<4x128xf32>
    %204 = arith.truncf %203 : vector<4x128xf32> to vector<4x128xbf16>
    %c1_135 = arith.constant 1 : index
    %c0_136 = arith.constant 0 : index
    %c0_137 = arith.constant 0 : index
    %c0_138 = arith.constant 0 : index
    %205 = vector.load %arg8[%c1_135, %c0_136, %c0_137, %c0_138] : memref<2x3x128x32xbf16, #tpu.memory_space<vmem>>, vector<1x1x128x32xbf16>
    %206 = vector.shape_cast %205 : vector<1x1x128x32xbf16> to vector<128x32xbf16>
    %cst_139 = arith.constant dense<0.000000e+00> : vector<4x32xf32>
    %207 = tpu.matmul %204, %206, %cst_139 {dimension_numbers = #tpu.dot_dimension_numbers<[1], [0], [0], [1], [0, 0, 1, 1], [], []>} : vector<4x128xbf16>, vector<128x32xbf16>, vector<4x32xf32> -> vector<4x32xf32>
    %c1_140 = arith.constant 1 : index
    %c1_141 = arith.constant 1 : index
    %c0_142 = arith.constant 0 : index
    %c0_143 = arith.constant 0 : index
    %208 = vector.load %arg8[%c1_140, %c1_141, %c0_142, %c0_143] : memref<2x3x128x32xbf16, #tpu.memory_space<vmem>>, vector<1x1x128x32xbf16>
    %209 = vector.shape_cast %208 : vector<1x1x128x32xbf16> to vector<128x32xbf16>
    %cst_144 = arith.constant dense<0.000000e+00> : vector<4x32xf32>
    %210 = tpu.matmul %193, %209, %cst_144 {dimension_numbers = #tpu.dot_dimension_numbers<[1], [0], [0], [1], [0, 0, 1, 1], [], []>} : vector<4x128xbf16>, vector<128x32xbf16>, vector<4x32xf32> -> vector<4x32xf32>
    %211 = arith.addf %207, %210 : vector<4x32xf32>
    %212 = tpu.iota {dimensions = array<i32: 0>} : vector<4x4xi32>
    %213 = tpu.iota {dimensions = array<i32: 1>} : vector<4x4xi32>
    %c-1_i32_145 = arith.constant -1 : i32
    %214 = vector.broadcast %c-1_i32_145 : i32 to vector<4x4xi32>
    %215 = arith.subi %212, %214 : vector<4x4xi32>
    %216 = arith.cmpi eq, %213, %215 : vector<4x4xi32>
    %cst_146 = arith.constant 1.000000e+00 : f32
    %cst_147 = arith.constant 0.000000e+00 : f32
    %217 = vector.broadcast %cst_146 : f32 to vector<4x4xf32>
    %218 = vector.broadcast %cst_147 : f32 to vector<4x4xf32>
    %219 = arith.select %216, %217, %218 : vector<4x4xi1>, vector<4x4xf32>
    %220 = arith.truncf %219 : vector<4x4xf32> to vector<4x4xbf16>
    %cst_148 = arith.constant dense<0.000000e+00> : vector<4x128xf32>
    %221 = tpu.matmul %220, %193, %cst_148 {dimension_numbers = #tpu.dot_dimension_numbers<[1], [0], [0], [1], [0, 0, 1, 1], [], []>} : vector<4x4xbf16>, vector<4x128xbf16>, vector<4x128xf32> -> vector<4x128xf32>
    %222 = arith.truncf %221 : vector<4x128xf32> to vector<4x128xbf16>
    %c1_149 = arith.constant 1 : index
    %c2_150 = arith.constant 2 : index
    %c0_151 = arith.constant 0 : index
    %c0_152 = arith.constant 0 : index
    %223 = vector.load %arg8[%c1_149, %c2_150, %c0_151, %c0_152] : memref<2x3x128x32xbf16, #tpu.memory_space<vmem>>, vector<1x1x128x32xbf16>
    %224 = vector.shape_cast %223 : vector<1x1x128x32xbf16> to vector<128x32xbf16>
    %cst_153 = arith.constant dense<0.000000e+00> : vector<4x32xf32>
    %225 = tpu.matmul %222, %224, %cst_153 {dimension_numbers = #tpu.dot_dimension_numbers<[1], [0], [0], [1], [0, 0, 1, 1], [], []>} : vector<4x128xbf16>, vector<128x32xbf16>, vector<4x32xf32> -> vector<4x32xf32>
    %226 = arith.addf %211, %225 : vector<4x32xf32>
    %c1_154 = arith.constant 1 : index
    %c0_155 = arith.constant 0 : index
    %c0_156 = arith.constant 0 : index
    %227 = vector.load %arg9[%c1_154, %c0_155, %c0_156] : memref<2x1x32xf32, #tpu.memory_space<vmem>>, vector<1x1x32xf32>
    %228 = vector.shape_cast %227 : vector<1x1x32xf32> to vector<1x32xf32>
    %229 = vector.broadcast %228 : vector<1x32xf32> to vector<4x32xf32>
    %230 = arith.addf %226, %229 : vector<4x32xf32>
    %cst_157 = arith.constant 0.000000e+00 : f32
    %231 = vector.broadcast %cst_157 : f32 to vector<4x32xf32>
    %232 = arith.maximumf %230, %231 : vector<4x32xf32>
    %233 = arith.truncf %232 : vector<4x32xf32> to vector<4x32xbf16>
    %c1_158 = arith.constant 1 : index
    %c0_159 = arith.constant 0 : index
    %c0_160 = arith.constant 0 : index
    %c0_161 = arith.constant 0 : index
    %234 = vector.load %arg10[%c1_158, %c0_159, %c0_160, %c0_161] : memref<2x1x32x128xbf16, #tpu.memory_space<vmem>>, vector<1x1x32x128xbf16>
    %235 = vector.shape_cast %234 : vector<1x1x32x128xbf16> to vector<32x128xbf16>
    %cst_162 = arith.constant dense<0.000000e+00> : vector<4x128xf32>
    %236 = tpu.matmul %233, %235, %cst_162 {dimension_numbers = #tpu.dot_dimension_numbers<[1], [0], [0], [1], [0, 0, 1, 1], [], []>} : vector<4x32xbf16>, vector<32x128xbf16>, vector<4x128xf32> -> vector<4x128xf32>
    %237 = arith.addf %190, %236 : vector<4x128xf32>
    %c1_163 = arith.constant 1 : index
    %c0_164 = arith.constant 0 : index
    %c0_165 = arith.constant 0 : index
    %238 = vector.load %arg11[%c1_163, %c0_164, %c0_165] : memref<2x1x128xf32, #tpu.memory_space<vmem>>, vector<1x1x128xf32>
    %239 = vector.shape_cast %238 : vector<1x1x128xf32> to vector<1x128xf32>
    %240 = vector.broadcast %239 : vector<1x128xf32> to vector<4x128xf32>
    %241 = arith.addf %237, %240 : vector<4x128xf32>
    %cst_166 = arith.constant 0.000000e+00 : f32
    %242 = vector.broadcast %cst_166 : f32 to vector<4x128xf32>
    %243 = arith.maximumf %241, %242 : vector<4x128xf32>
    %c0_167 = arith.constant 0 : index
    %c0_168 = arith.constant 0 : index
    %c0_169 = arith.constant 0 : index
    %244 = vector.load %arg12[%c0_167, %c0_168, %c0_169] : memref<1x4x128xf32, #tpu.memory_space<vmem>>, vector<1x4x128xf32>
    %245 = vector.shape_cast %244 : vector<1x4x128xf32> to vector<4x128xf32>
    %246 = vector.shape_cast %243 : vector<4x128xf32> to vector<1x4x128xf32>
    tpu.vector_store %arg12[%c0_167, %c0_168, %c0_169], %246 {strides = array<i32>} : memref<1x4x128xf32, #tpu.memory_space<vmem>>, vector<1x4x128xf32>,
    return
  }
  func.func @transform_0(%arg0: i32) -> (i32, i32, i32, i32) {
    %c0_i32 = arith.constant 0 : i32
    %c0_i32_0 = arith.constant 0 : i32
    %c0_i32_1 = arith.constant 0 : i32
    %c0_i32_2 = arith.constant 0 : i32
    return %arg0, %c0_i32, %c0_i32_0, %c0_i32_1 : i32, i32, i32, i32
  }
  func.func @transform_1(%arg0: i32) -> (i32, i32, i32) {
    %c0_i32 = arith.constant 0 : i32
    %c0_i32_0 = arith.constant 0 : i32
    %c0_i32_1 = arith.constant 0 : i32
    %c0_i32_2 = arith.constant 0 : i32
    return %c0_i32, %c0_i32_0, %c0_i32_1 : i32, i32, i32
  }
  func.func @transform_2(%arg0: i32) -> (i32, i32) {
    %c0_i32 = arith.constant 0 : i32
    %c0_i32_0 = arith.constant 0 : i32
    %c0_i32_1 = arith.constant 0 : i32
    return %c0_i32, %c0_i32_0 : i32, i32
  }
  func.func @transform_3(%arg0: i32) -> (i32, i32, i32) {
    %c0_i32 = arith.constant 0 : i32
    %c0_i32_0 = arith.constant 0 : i32
    %c0_i32_1 = arith.constant 0 : i32
    %c0_i32_2 = arith.constant 0 : i32
    return %c0_i32, %c0_i32_0, %c0_i32_1 : i32, i32, i32
  }
  func.func @transform_4(%arg0: i32) -> (i32, i32) {
    %c0_i32 = arith.constant 0 : i32
    %c0_i32_0 = arith.constant 0 : i32
    %c0_i32_1 = arith.constant 0 : i32
    return %c0_i32, %c0_i32_0 : i32, i32
  }
  func.func @transform_5(%arg0: i32) -> (i32, i32, i32) {
    %c0_i32 = arith.constant 0 : i32
    %c0_i32_0 = arith.constant 0 : i32
    %c0_i32_1 = arith.constant 0 : i32
    %c0_i32_2 = arith.constant 0 : i32
    return %c0_i32, %c0_i32_0, %c0_i32_1 : i32, i32, i32
  }
  func.func @transform_6(%arg0: i32) -> (i32, i32) {
    %c0_i32 = arith.constant 0 : i32
    %c0_i32_0 = arith.constant 0 : i32
    %c0_i32_1 = arith.constant 0 : i32
    return %c0_i32, %c0_i32_0 : i32, i32
  }
  func.func @transform_7(%arg0: i32) -> (i32, i32, i32, i32) {
    %c0_i32 = arith.constant 0 : i32
    %c0_i32_0 = arith.constant 0 : i32
    %c0_i32_1 = arith.constant 0 : i32
    %c0_i32_2 = arith.constant 0 : i32
    %c0_i32_3 = arith.constant 0 : i32
    return %c0_i32, %c0_i32_0, %c0_i32_1, %c0_i32_2 : i32, i32, i32, i32
  }
  func.func @transform_8(%arg0: i32) -> (i32, i32, i32) {
    %c0_i32 = arith.constant 0 : i32
    %c0_i32_0 = arith.constant 0 : i32
    %c0_i32_1 = arith.constant 0 : i32
    %c0_i32_2 = arith.constant 0 : i32
    return %c0_i32, %c0_i32_0, %c0_i32_1 : i32, i32, i32
  }
  func.func @transform_9(%arg0: i32) -> (i32, i32, i32, i32) {
    %c0_i32 = arith.constant 0 : i32
    %c0_i32_0 = arith.constant 0 : i32
    %c0_i32_1 = arith.constant 0 : i32
    %c0_i32_2 = arith.constant 0 : i32
    %c0_i32_3 = arith.constant 0 : i32
    return %c0_i32, %c0_i32_0, %c0_i32_1, %c0_i32_2 : i32, i32, i32, i32
  }
  func.func @transform_10(%arg0: i32) -> (i32, i32, i32) {
    %c0_i32 = arith.constant 0 : i32
    %c0_i32_0 = arith.constant 0 : i32
    %c0_i32_1 = arith.constant 0 : i32
    %c0_i32_2 = arith.constant 0 : i32
    return %c0_i32, %c0_i32_0, %c0_i32_1 : i32, i32, i32
  }
  func.func @transform_11(%arg0: i32) -> (i32, i32, i32) {
    %c0_i32 = arith.constant 0 : i32
    %c0_i32_0 = arith.constant 0 : i32
    %c0_i32_1 = arith.constant 0 : i32
    return %arg0, %c0_i32, %c0_i32_0 : i32, i32, i32
  }
}

</mosaic_0001>

<llo_original>
// kernel: tile.38
$region0: #{tile.38}
  #allocation0 [shape = 's32[1]{0}', space=sflag, size = 0x4, scoped, tag = 'scoped memory for tile.38']
  %s0 = inlined_call_operand.vmem [shape: f32[16], index: 0, kind: input, shape index: {}]
  %s1 = inlined_call_operand.vmem [shape: f32[8,16], index: 1, kind: output, shape index: {}]
  // Predicated region
  $region2: #{tile.38} parent=0 // pred_check
    _
  $region3: #{tile.38} parent=0 // pred_check_branch
    %3 = sbr.rel (0) target = $region5
  $region4: #{tile.38} parent=0 // pred_region
    _
  $region5: #{tile.38} parent=0 // pred_fallthru
    _
  %v4 = vld [vmem:[%s0] ss:$0 sm:$0xff]
  %5 = vst [vmem:[%s1] sm:$0xff] %v4

// kernel: tile.39
$region0: #{tile.39}
  %s0 = inlined_call_operand.vmem [shape: f32[8,16], index: 0, kind: input, shape index: {}]
  %s1 = inlined_call_operand.vmem [shape: f32[1,128], index: 1, kind: output, shape index: {}]
  $region1: #{tile.39} parent=0
    #allocation0 [shape = 'u8[4096]{0}', space=vmem, size = 0x1000, scoped, tag = 'scoped mem for output reshape']
    %v2 = vld [vmem:[%s0] sm:$0x1]
    %vm3 = vcmask 130048
    %4 = vst.msk [vmem:[#allocation0] sm:$0x1] %vm3, %v2
    %s5 = scalar_lea.vmem %s0, 7
    %v6 = vld [vmem:[%s5] sm:$0x1]
    %7 = vrot.lane.b32.xlu0 %v6, 112
    %v8 = vpop.permute.xlu0 %7
    %vm9 = vcmask 1048448
    %10 = vst.msk [vmem:[#allocation0] sm:$0x1] %vm9, %v8
    %s11 = scalar_lea.vmem %s0, 6
    %v12 = vld [vmem:[%s11] sm:$0x1]
    %13 = vrot.lane.b32.xlu0 %v12, 96
    %v14 = vpop.permute.xlu0 %13
    %vm15 = vcmask 917248
    %16 = vst.msk [vmem:[#allocation0] sm:$0x1] %vm15, %v14
    %s17 = scalar_lea.vmem %s0, 5
    %v18 = vld [vmem:[%s17] sm:$0x1]
    %19 = vrot.lane.b32.xlu0 %v18, 80
    %v20 = vpop.permute.xlu0 %19
    %vm21 = vcmask 786048
    %22 = vst.msk [vmem:[#allocation0] sm:$0x1] %vm21, %v20
    %s23 = scalar_lea.vmem %s0, 4
    %v24 = vld [vmem:[%s23] sm:$0x1]
    %25 = vrot.lane.b32.xlu0 %v24, 64
    %v26 = vpop.permute.xlu0 %25
    %vm27 = vcmask 654848
    %28 = vst.msk [vmem:[#allocation0] sm:$0x1] %vm27, %v26
    %s29 = scalar_lea.vmem %s0, 3
    %v30 = vld [vmem:[%s29] sm:$0x1]
    %31 = vrot.lane.b32.xlu0 %v30, 48
    %v32 = vpop.permute.xlu0 %31
    %vm33 = vcmask 523648
    %34 = vst.msk [vmem:[#allocation0] sm:$0x1] %vm33, %v32
    %s35 = scalar_lea.vmem %s0, 2
    %v36 = vld [vmem:[%s35] sm:$0x1]
    %37 = vrot.lane.b32.xlu0 %v36, 32
    %v38 = vpop.permute.xlu0 %37
    %vm39 = vcmask 392448
    %40 = vst.msk [vmem:[#allocation0] sm:$0x1] %vm39, %v38
    %s41 = scalar_lea.vmem %s0, 1
    %v42 = vld [vmem:[%s41] sm:$0x1]
    %43 = vrot.lane.b32.xlu0 %v42, 16
    %v44 = vpop.permute.xlu0 %43
    %vm45 = vcmask 261248
    %46 = vst.msk [vmem:[#allocation0] sm:$0x1] %vm45, %v44
    %s48 = ssub.s32 2, 1
    %v49 = vld [vmem:[#allocation0] sm:%s48]
    %s51 = ssub.s32 2, 1
    %52 = vst [vmem:[%s1] sm:%s51] %v49

// kernel: tile.43
$region0: #{tile.43}
  #allocation0 [shape = 's32[1]{0}', space=sflag, size = 0x4, scoped, tag = 'scoped memory for tile.43']
  %s0 = inlined_call_operand.vmem [shape: f32[32], index: 0, kind: input, shape index: {}]
  %s1 = inlined_call_operand.vmem [shape: f32[4,32], index: 1, kind: output, shape index: {}]
  // Predicated region
  $region2: #{tile.43} parent=0 // pred_check
    _
  $region3: #{tile.43} parent=0 // pred_check_branch
    %3 = sbr.rel (0) target = $region5
  $region4: #{tile.43} parent=0 // pred_region
    _
  $region5: #{tile.43} parent=0 // pred_fallthru
    _
  %v4 = vld [vmem:[%s0] ss:$0 sm:$0xff]
  %5 = vst [vmem:[%s1] sm:$0xf] %v4

// kernel: tile.44
$region0: #{tile.44}
  %s0 = inlined_call_operand.vmem [shape: f32[4,32], index: 0, kind: input, shape index: {}]
  %s1 = inlined_call_operand.vmem [shape: f32[1,128], index: 1, kind: output, shape index: {}]
  $region1: #{tile.44} parent=0
    #allocation0 [shape = 'u8[4096]{0}', space=vmem, size = 0x1000, scoped, tag = 'scoped mem for output reshape']
    #allocation1 [shape = 'u8[4096]{0}', space=vmem, size = 0x1000, scoped, tag = 'scoped mem for input reshape']
    %s3 = ssub.s32 16, 1
    %v4 = vld [vmem:[%s0] sm:%s3]
    %5 = vst [vmem:[#allocation1] sm:%s3] %v4
    %v6 = vld [vmem:[#allocation1] sm:$0x1]
    %vm7 = vcmask 261120
    %8 = vst.msk [vmem:[#allocation0] sm:$0x1] %vm7, %v6
    %s9 = scalar_lea.vmem [#allocation1], 3
    %v10 = vld [vmem:[%s9] sm:$0x1]
    %11 = vrot.lane.b32.xlu0 %v10, 96
    %v12 = vpop.permute.xlu0 %11
    %vm13 = vcmask 1048320
    %14 = vst.msk [vmem:[#allocation0] sm:$0x1] %vm13, %v12
    %s15 = scalar_lea.vmem [#allocation1], 2
    %v16 = vld [vmem:[%s15] sm:$0x1]
    %17 = vrot.lane.b32.xlu0 %v16, 64
    %v18 = vpop.permute.xlu0 %17
    %vm19 = vcmask 785920
    %20 = vst.msk [vmem:[#allocation0] sm:$0x1] %vm19, %v18
    %s21 = scalar_lea.vmem [#allocation1], 1
    %v22 = vld [vmem:[%s21] sm:$0x1]
    %23 = vrot.lane.b32.xlu0 %v22, 32
    %v24 = vpop.permute.xlu0 %23
    %vm25 = vcmask 523520
    %26 = vst.msk [vmem:[#allocation0] sm:$0x1] %vm25, %v24
    %s28 = ssub.s32 2, 1
    %v29 = vld [vmem:[#allocation0] sm:%s28]
    %s31 = ssub.s32 2, 1
    %32 = vst [vmem:[%s1] sm:%s31] %v29

// kernel: tile.57
$region0: #{tile.57}
  #allocation0 [shape = 's32[1]{0}', space=sflag, size = 0x4, scoped, tag = 'scoped memory for tile.57']
  %s0 = inlined_call_operand.vmem [shape: f32[8], index: 0, kind: input, shape index: {}]
  %s1 = inlined_call_operand.vmem [shape: f32[4,8], index: 1, kind: output, shape index: {}]
  // Predicated region
  $region2: #{tile.57} parent=0 // pred_check
    _
  $region3: #{tile.57} parent=0 // pred_check_branch
    %3 = sbr.rel (0) target = $region5
  $region4: #{tile.57} parent=0 // pred_region
    _
  $region5: #{tile.57} parent=0 // pred_fallthru
    _
  %v4 = vld [vmem:[%s0] ss:$0 sm:$0xff]
  %5 = vst [vmem:[%s1] sm:$0xf] %v4

// kernel: tile.59
$region0: #{tile.59}
  %s0 = inlined_call_operand.vmem [shape: f32[4,8], index: 0, kind: input, shape index: {}]
  %s1 = inlined_call_operand.vmem [shape: f32[1,1,32], index: 1, kind: output, shape index: {}]
  $region1: #{tile.59} parent=0
    #allocation0 [shape = 'u8[4096]{0}', space=vmem, size = 0x1000, scoped, tag = 'scoped mem for output reshape']
    #allocation1 [shape = 'u8[4096]{0}', space=vmem, size = 0x1000, scoped, tag = 'scoped mem for input reshape']
    %s3 = ssub.s32 16, 1
    %v4 = vld [vmem:[%s0] sm:%s3]
    %5 = vst [vmem:[#allocation1] sm:%s3] %v4
    %v6 = vld [vmem:[#allocation1] sm:$0x1]
    %vm7 = vcmask 64512
    %8 = vst.msk [vmem:[#allocation0] sm:$0x1] %vm7, %v6
    %s9 = scalar_lea.vmem [#allocation1], 3
    %v10 = vld [vmem:[%s9] sm:$0x1]
    %11 = vrot.lane.b32.xlu0 %v10, 24
    %v12 = vpop.permute.xlu0 %11
    %vm13 = vcmask 261312
    %14 = vst.msk [vmem:[#allocation0] sm:$0x1] %vm13, %v12
    %s15 = scalar_lea.vmem [#allocation1], 2
    %v16 = vld [vmem:[%s15] sm:$0x1]
    %17 = vrot.lane.b32.xlu0 %v16, 16
    %v18 = vpop.permute.xlu0 %17
    %vm19 = vcmask 195712
    %20 = vst.msk [vmem:[#allocation0] sm:$0x1] %vm19, %v18
    %s21 = scalar_lea.vmem [#allocation1], 1
    %v22 = vld [vmem:[%s21] sm:$0x1]
    %23 = vrot.lane.b32.xlu0 %v22, 8
    %v24 = vpop.permute.xlu0 %23
    %vm25 = vcmask 130112
    %26 = vst.msk [vmem:[#allocation0] sm:$0x1] %vm25, %v24
    %s28 = ssub.s32 2, 1
    %v29 = vld [vmem:[#allocation0] sm:%s28]
    %s31 = ssub.s32 2, 1
    %32 = vst [vmem:[%s1] sm:%s31] %v29

// kernel: tile.69
$region0: #{tile.69}
  %s0 = inlined_call_operand.vmem [shape: f32[4,32], index: 0, kind: input, shape index: {}]
  %s1 = inlined_call_operand.vmem [shape: f32[1,1,128], index: 1, kind: output, shape index: {}]
  $region1: #{tile.69} parent=0
    #allocation0 [shape = 'u8[4096]{0}', space=vmem, size = 0x1000, scoped, tag = 'scoped mem for output reshape']
    #allocation1 [shape = 'u8[4096]{0}', space=vmem, size = 0x1000, scoped, tag = 'scoped mem for input reshape']
    %s3 = ssub.s32 16, 1
    %v4 = vld [vmem:[%s0] sm:%s3]
    %5 = vst [vmem:[#allocation1] sm:%s3] %v4
    %v6 = vld [vmem:[#allocation1] sm:$0x1]
    %vm7 = vcmask 261120
    %8 = vst.msk [vmem:[#allocation0] sm:$0x1] %vm7, %v6
    %s9 = scalar_lea.vmem [#allocation1], 3
    %v10 = vld [vmem:[%s9] sm:$0x1]
    %11 = vrot.lane.b32.xlu0 %v10, 96
    %v12 = vpop.permute.xlu0 %11
    %vm13 = vcmask 1048320
    %14 = vst.msk [vmem:[#allocation0] sm:$0x1] %vm13, %v12
    %s15 = scalar_lea.vmem [#allocation1], 2
    %v16 = vld [vmem:[%s15] sm:$0x1]
    %17 = vrot.lane.b32.xlu0 %v16, 64
    %v18 = vpop.permute.xlu0 %17
    %vm19 = vcmask 785920
    %20 = vst.msk [vmem:[#allocation0] sm:$0x1] %vm19, %v18
    %s21 = scalar_lea.vmem [#allocation1], 1
    %v22 = vld [vmem:[%s21] sm:$0x1]
    %23 = vrot.lane.b32.xlu0 %v22, 32
    %v24 = vpop.permute.xlu0 %23
    %vm25 = vcmask 523520
    %26 = vst.msk [vmem:[#allocation0] sm:$0x1] %vm25, %v24
    %s28 = ssub.s32 2, 1
    %v29 = vld [vmem:[#allocation0] sm:%s28]
    %s31 = ssub.s32 2, 1
    %32 = vst [vmem:[%s1] sm:%s31] %v29

// kernel: encoder_forward.1
$region0: #{encoder_forward.1}
  #allocation0 [shape = 'u32[]', space=smem, size = 0x4, offset = 0x4, fixed_abs, tag = 'smem constant byte address 0x4 - core index']
  #allocation1 [shape = 'u32[72,128]{1,0:T(1,128)}', space=vmem, size = 0x9000, scoped, tag = 'internal scratch']
  %s0 = inlined_call_operand.vmem [shape: f32[2,4,5,64], index: 0, kind: input, shape index: {}]
  %s1 = inlined_call_operand.vmem [shape: bf16[4,64,128], index: 1, kind: input, shape index: {}]
  %s2 = inlined_call_operand.vmem [shape: f32[1,128], index: 2, kind: input, shape index: {}]
  %s3 = inlined_call_operand.vmem [shape: bf16[4,128,128], index: 3, kind: input, shape index: {}]
  %s4 = inlined_call_operand.vmem [shape: f32[1,128], index: 4, kind: input, shape index: {}]
  %s5 = inlined_call_operand.vmem [shape: bf16[3,128,128], index: 5, kind: input, shape index: {}]
  %s6 = inlined_call_operand.vmem [shape: f32[1,128], index: 6, kind: input, shape index: {}]
  %s7 = inlined_call_operand.vmem [shape: bf16[2,3,128,32], index: 7, kind: input, shape index: {}]
  %s8 = inlined_call_operand.vmem [shape: f32[2,1,32], index: 8, kind: input, shape index: {}]
  %s9 = inlined_call_operand.vmem [shape: bf16[2,1,32,128], index: 9, kind: input, shape index: {}]
  %s10 = inlined_call_operand.vmem [shape: f32[2,1,128], index: 10, kind: input, shape index: {}]
  %s11 = inlined_call_operand.vmem [shape: f32[2,4,128], index: 11, kind: output, shape index: {}]
  %s12 = sld [smem:[#allocation0]]
  $region77: #{encoder_forward.1} parent=0
    _
  %s14 = ssub.s32 1, %s12
  %s15 = scalar_select 0, %s14, %s12
  loop: start=0, step=1, limit=4
  $region2: #{encoder_forward.1} parent=0 // loop_pre_header
    _
  $region3: #{encoder_forward.1} parent=0 // loop_header
    %s17 = sphi 0, %s21
    %p18 = scmp.ge.s32.totalorder %s17, 4
    %s27 = sphi 0, %s29
    %s30 = sphi 0, %s27
    %s31 = sphi 0, %s30
    %s47 = sphi 0, %s31
    %s51 = sphi 0, %s51
    %s53 = sphi 0, %s51
    %s54 = sphi 0, %s53
    %s68 = sphi 0, %s54
    %s72 = sphi 0, %s72
    %s74 = sphi 0, %s72
    %s75 = sphi 0, %s74
    %s89 = sphi 0, %s75
    %s93 = sphi 0, %s93
    %s95 = sphi 0, %s93
    %s96 = sphi 0, %s95
    %s110 = sphi 0, %s96
    %s114 = sphi 0, %s114
    %s116 = sphi 0, %s114
    %s117 = sphi 0, %s116
    %s131 = sphi 0, %s117
    %s135 = sphi 0, %s135
    %s137 = sphi 0, %s135
    %s138 = sphi 0, %s137
    %s152 = sphi 0, %s138
    %s156 = sphi 0, %s156
    %s158 = sphi 0, %s156
    %s159 = sphi 0, %s158
    %s173 = sphi 0, %s159
    %s177 = sphi 0, %s177
    %s179 = sphi 0, %s177
    %s180 = sphi 0, %s179
    %s194 = sphi 0, %s180
    %s198 = sphi 0, %s198
    %s200 = sphi 0, %s198
    %s201 = sphi 0, %s200
    %s215 = sphi 0, %s201
    %s219 = sphi 0, %s219
    %s221 = sphi 0, %s219
    %s222 = sphi 0, %s221
    %s236 = sphi 0, %s222
    %s240 = sphi 0, %s240
    %s242 = sphi 0, %s240
    %s243 = sphi 0, %s242
    %s257 = sphi 0, %s243
    %s263 = sphi 0, %s265
    %s266 = sphi 0, %s263
    %s267 = sphi 0, %s266
    %s283 = sphi 0, %s267
  $region4: #{encoder_forward.1} parent=0 // loop_header_branch
    %20 = sbr.rel (%p18) target = $region8
  $region5: #{encoder_forward.1} parent=0 // loop_body
    %s22 = ssub.s32 %s17, 1
    %s23 = ssub.s32 %s17, 2
    %s24 = sadd.s32 %s17, 1
    %s25 = ssub.s32 %s17, %s24
    %p26 = scmp.eq.s32.totalorder %s25, 0
    %s28 = sadd.s32 %s27, 1
    %s29 = scalar_select %p26, %s27, %s28
    %p32 = pneg %p26
    %p33 = scmp.eq.s32.totalorder %s17, 1
    %p34 = por %p32, %p33
    %p35 = scmp.ne.s32.totalorder %s27, %s30
    %p36 = scmp.eq.s32.totalorder %s17, 0
    %p37 = por %p35, %p36
    %p38 = scmp.ne.s32.totalorder %s27, %s30
    %p39 = scmp.eq.s32.totalorder %s22, 1
    %p40 = por %p38, %p39
    %p41 = scmp.ne.s32.totalorder %s30, %s31
    %p42 = scmp.eq.s32.totalorder %s22, 0
    %p43 = por %p41, %p42
    %p44 = scmp.ne.s32.totalorder %s30, %s31
    %p45 = scmp.eq.s32.totalorder %s23, 1
    %p46 = por %p44, %p45
    %p48 = scmp.ne.s32.totalorder %s31, %s47
    %p49 = scmp.eq.s32.totalorder %s23, 0
    %p50 = por %p48, %p49
    %s52 = sadd.s32 %s51, 1
    %p55 = scmp.eq.s32.totalorder %s17, 1
    %p56 = scmp.ne.s32.totalorder %s51, %s53
    %p57 = scmp.eq.s32.totalorder %s17, 0
    %p58 = por %p56, %p57
    %p59 = scmp.ne.s32.totalorder %s51, %s53
    %p60 = scmp.eq.s32.totalorder %s22, 1
    %p61 = por %p59, %p60
    %p62 = scmp.ne.s32.totalorder %s53, %s54
    %p63 = scmp.eq.s32.totalorder %s22, 0
    %p64 = por %p62, %p63
    %p65 = scmp.ne.s32.totalorder %s53, %s54
    %p66 = scmp.eq.s32.totalorder %s23, 1
    %p67 = por %p65, %p66
    %p69 = scmp.ne.s32.totalorder %s54, %s68
    %p70 = scmp.eq.s32.totalorder %s23, 0
    %p71 = por %p69, %p70
    %s73 = sadd.s32 %s72, 1
    %p76 = scmp.eq.s32.totalorder %s17, 1
    %p77 = scmp.ne.s32.totalorder %s72, %s74
    %p78 = scmp.eq.s32.totalorder %s17, 0
    %p79 = por %p77, %p78
    %p80 = scmp.ne.s32.totalorder %s72, %s74
    %p81 = scmp.eq.s32.totalorder %s22, 1
    %p82 = por %p80, %p81
    %p83 = scmp.ne.s32.totalorder %s74, %s75
    %p84 = scmp.eq.s32.totalorder %s22, 0
    %p85 = por %p83, %p84
    %p86 = scmp.ne.s32.totalorder %s74, %s75
    %p87 = scmp.eq.s32.totalorder %s23, 1
    %p88 = por %p86, %p87
    %p90 = scmp.ne.s32.totalorder %s75, %s89
    %p91 = scmp.eq.s32.totalorder %s23, 0
    %p92 = por %p90, %p91
    %s94 = sadd.s32 %s93, 1
    %p97 = scmp.eq.s32.totalorder %s17, 1
    %p98 = scmp.ne.s32.totalorder %s93, %s95
    %p99 = scmp.eq.s32.totalorder %s17, 0
    %p100 = por %p98, %p99
    %p101 = scmp.ne.s32.totalorder %s93, %s95
    %p102 = scmp.eq.s32.totalorder %s22, 1
    %p103 = por %p101, %p102
    %p104 = scmp.ne.s32.totalorder %s95, %s96
    %p105 = scmp.eq.s32.totalorder %s22, 0
    %p106 = por %p104, %p105
    %p107 = scmp.ne.s32.totalorder %s95, %s96
    %p108 = scmp.eq.s32.totalorder %s23, 1
    %p109 = por %p107, %p108
    %p111 = scmp.ne.s32.totalorder %s96, %s110
    %p112 = scmp.eq.s32.totalorder %s23, 0
    %p113 = por %p111, %p112
    %s115 = sadd.s32 %s114, 1
    %p118 = scmp.eq.s32.totalorder %s17, 1
    %p119 = scmp.ne.s32.totalorder %s114, %s116
    %p120 = scmp.eq.s32.totalorder %s17, 0
    %p121 = por %p119, %p120
    %p122 = scmp.ne.s32.totalorder %s114, %s116
    %p123 = scmp.eq.s32.totalorder %s22, 1
    %p124 = por %p122, %p123
    %p125 = scmp.ne.s32.totalorder %s116, %s117
    %p126 = scmp.eq.s32.totalorder %s22, 0
    %p127 = por %p125, %p126
    %p128 = scmp.ne.s32.totalorder %s116, %s117
    %p129 = scmp.eq.s32.totalorder %s23, 1
    %p130 = por %p128, %p129
    %p132 = scmp.ne.s32.totalorder %s117, %s131
    %p133 = scmp.eq.s32.totalorder %s23, 0
    %p134 = por %p132, %p133
    %s136 = sadd.s32 %s135, 1
    %p139 = scmp.eq.s32.totalorder %s17, 1
    %p140 = scmp.ne.s32.totalorder %s135, %s137
    %p141 = scmp.eq.s32.totalorder %s17, 0
    %p142 = por %p140, %p141
    %p143 = scmp.ne.s32.totalorder %s135, %s137
    %p144 = scmp.eq.s32.totalorder %s22, 1
    %p145 = por %p143, %p144
    %p146 = scmp.ne.s32.totalorder %s137, %s138
    %p147 = scmp.eq.s32.totalorder %s22, 0
    %p148 = por %p146, %p147
    %p149 = scmp.ne.s32.totalorder %s137, %s138
    %p150 = scmp.eq.s32.totalorder %s23, 1
    %p151 = por %p149, %p150
    %p153 = scmp.ne.s32.totalorder %s138, %s152
    %p154 = scmp.eq.s32.totalorder %s23, 0
    %p155 = por %p153, %p154
    %s157 = sadd.s32 %s156, 1
    %p160 = scmp.eq.s32.totalorder %s17, 1
    %p161 = scmp.ne.s32.totalorder %s156, %s158
    %p162 = scmp.eq.s32.totalorder %s17, 0
    %p163 = por %p161, %p162
    %p164 = scmp.ne.s32.totalorder %s156, %s158
    %p165 = scmp.eq.s32.totalorder %s22, 1
    %p166 = por %p164, %p165
    %p167 = scmp.ne.s32.totalorder %s158, %s159
    %p168 = scmp.eq.s32.totalorder %s22, 0
    %p169 = por %p167, %p168
    %p170 = scmp.ne.s32.totalorder %s158, %s159
    %p171 = scmp.eq.s32.totalorder %s23, 1
    %p172 = por %p170, %p171
    %p174 = scmp.ne.s32.totalorder %s159, %s173
    %p175 = scmp.eq.s32.totalorder %s23, 0
    %p176 = por %p174, %p175
    %s178 = sadd.s32 %s177, 1
    %p181 = scmp.eq.s32.totalorder %s17, 1
    %p182 = scmp.ne.s32.totalorder %s177, %s179
    %p183 = scmp.eq.s32.totalorder %s17, 0
    %p184 = por %p182, %p183
    %p185 = scmp.ne.s32.totalorder %s177, %s179
    %p186 = scmp.eq.s32.totalorder %s22, 1
    %p187 = por %p185, %p186
    %p188 = scmp.ne.s32.totalorder %s179, %s180
    %p189 = scmp.eq.s32.totalorder %s22, 0
    %p190 = por %p188, %p189
    %p191 = scmp.ne.s32.totalorder %s179, %s180
    %p192 = scmp.eq.s32.totalorder %s23, 1
    %p193 = por %p191, %p192
    %p195 = scmp.ne.s32.totalorder %s180, %s194
    %p196 = scmp.eq.s32.totalorder %s23, 0
    %p197 = por %p195, %p196
    %s199 = sadd.s32 %s198, 1
    %p202 = scmp.eq.s32.totalorder %s17, 1
    %p203 = scmp.ne.s32.totalorder %s198, %s200
    %p204 = scmp.eq.s32.totalorder %s17, 0
    %p205 = por %p203, %p204
    %p206 = scmp.ne.s32.totalorder %s198, %s200
    %p207 = scmp.eq.s32.totalorder %s22, 1
    %p208 = por %p206, %p207
    %p209 = scmp.ne.s32.totalorder %s200, %s201
    %p210 = scmp.eq.s32.totalorder %s22, 0
    %p211 = por %p209, %p210
    %p212 = scmp.ne.s32.totalorder %s200, %s201
    %p213 = scmp.eq.s32.totalorder %s23, 1
    %p214 = por %p212, %p213
    %p216 = scmp.ne.s32.totalorder %s201, %s215
    %p217 = scmp.eq.s32.totalorder %s23, 0
    %p218 = por %p216, %p217
    %s220 = sadd.s32 %s219, 1
    %p223 = scmp.eq.s32.totalorder %s17, 1
    %p224 = scmp.ne.s32.totalorder %s219, %s221
    %p225 = scmp.eq.s32.totalorder %s17, 0
    %p226 = por %p224, %p225
    %p227 = scmp.ne.s32.totalorder %s219, %s221
    %p228 = scmp.eq.s32.totalorder %s22, 1
    %p229 = por %p227, %p228
    %p230 = scmp.ne.s32.totalorder %s221, %s222
    %p231 = scmp.eq.s32.totalorder %s22, 0
    %p232 = por %p230, %p231
    %p233 = scmp.ne.s32.totalorder %s221, %s222
    %p234 = scmp.eq.s32.totalorder %s23, 1
    %p235 = por %p233, %p234
    %p237 = scmp.ne.s32.totalorder %s222, %s236
    %p238 = scmp.eq.s32.totalorder %s23, 0
    %p239 = por %p237, %p238
    %s241 = sadd.s32 %s240, 1
    %p244 = scmp.eq.s32.totalorder %s17, 1
    %p245 = scmp.ne.s32.totalorder %s240, %s242
    %p246 = scmp.eq.s32.totalorder %s17, 0
    %p247 = por %p245, %p246
    %p248 = scmp.ne.s32.totalorder %s240, %s242
    %p249 = scmp.eq.s32.totalorder %s22, 1
    %p250 = por %p248, %p249
    %p251 = scmp.ne.s32.totalorder %s242, %s243
    %p252 = scmp.eq.s32.totalorder %s22, 0
    %p253 = por %p251, %p252
    %p254 = scmp.ne.s32.totalorder %s242, %s243
    %p255 = scmp.eq.s32.totalorder %s23, 1
    %p256 = por %p254, %p255
    %p258 = scmp.ne.s32.totalorder %s243, %s257
    %p259 = scmp.eq.s32.totalorder %s23, 0
    %p260 = por %p258, %p259
    %s261 = ssub.s32 %s17, %s24
    %p262 = scmp.eq.s32.totalorder %s261, 0
    %s264 = sadd.s32 %s263, 1
    %s265 = scalar_select %p262, %s263, %s264
    %p268 = pneg %p262
    %p269 = scmp.eq.s32.totalorder %s17, 1
    %p270 = por %p268, %p269
    %p271 = scmp.ne.s32.totalorder %s263, %s266
    %p272 = scmp.eq.s32.totalorder %s17, 0
    %p273 = por %p271, %p272
    %p274 = scmp.ne.s32.totalorder %s263, %s266
    %p275 = scmp.eq.s32.totalorder %s22, 1
    %p276 = por %p274, %p275
    %p277 = scmp.ne.s32.totalorder %s266, %s267
    %p278 = scmp.eq.s32.totalorder %s22, 0
    %p279 = por %p277, %p278
    %p280 = scmp.ne.s32.totalorder %s266, %s267
    %p281 = scmp.eq.s32.totalorder %s23, 1
    %p282 = por %p280, %p281
    %p284 = scmp.ne.s32.totalorder %s267, %s283
    %p285 = scmp.eq.s32.totalorder %s23, 0
    %p286 = por %p284, %p285
    %p287 = scmp.le.s32.totalorder 1, %s17
    %p288 = scmp.lt.s32.totalorder %s17, 3
    %p289 = pnand %p287, %p288
    %p290 = pneg %p289
    // Predicated region
    $region9: #{encoder_forward.1} parent=5 // pred_check
      _
    $region10: #{encoder_forward.1} parent=5 // pred_check_branch
      %292 = sbr.rel (%p289) target = $region12
    $region11: #{encoder_forward.1} parent=5 // pred_region
      %s293 = ssub.s32 %s17, 1
      // Predicated region
      $region13: #{encoder_forward.1} parent=11 // pred_check
        %p294 = pneg %p64
      $region14: #{encoder_forward.1} parent=11 // pred_check_branch
        %296 = sbr.rel (%p294) target = $region16
      $region15: #{encoder_forward.1} parent=11 // pred_region
        _
      $region16: #{encoder_forward.1} parent=11 // pred_fallthru
        _
      // Predicated region
      $region17: #{encoder_forward.1} parent=11 // pred_check
        %p297 = pneg %p85
      $region18: #{encoder_forward.1} parent=11 // pred_check_branch
        %299 = sbr.rel (%p297) target = $region20
      $region19: #{encoder_forward.1} parent=11 // pred_region
        _
      $region20: #{encoder_forward.1} parent=11 // pred_fallthru
        _
      // Predicated region
      $region21: #{encoder_forward.1} parent=11 // pred_check
        %p300 = pneg %p106
      $region22: #{encoder_forward.1} parent=11 // pred_check_branch
        %302 = sbr.rel (%p300) target = $region24
      $region23: #{encoder_forward.1} parent=11 // pred_region
        _
      $region24: #{encoder_forward.1} parent=11 // pred_fallthru
        _
      // Predicated region
      $region25: #{encoder_forward.1} parent=11 // pred_check
        %p303 = pneg %p127
      $region26: #{encoder_forward.1} parent=11 // pred_check_branch
        %305 = sbr.rel (%p303) target = $region28
      $region27: #{encoder_forward.1} parent=11 // pred_region
        _
      $region28: #{encoder_forward.1} parent=11 // pred_fallthru
        _
      // Predicated region
      $region29: #{encoder_forward.1} parent=11 // pred_check
        %p306 = pneg %p148
      $region30: #{encoder_forward.1} parent=11 // pred_check_branch
        %308 = sbr.rel (%p306) target = $region32
      $region31: #{encoder_forward.1} parent=11 // pred_region
        _
      $region32: #{encoder_forward.1} parent=11 // pred_fallthru
        _
      // Predicated region
      $region33: #{encoder_forward.1} parent=11 // pred_check
        %p309 = pneg %p169
      $region34: #{encoder_forward.1} parent=11 // pred_check_branch
        %311 = sbr.rel (%p309) target = $region36
      $region35: #{encoder_forward.1} parent=11 // pred_region
        _
      $region36: #{encoder_forward.1} parent=11 // pred_fallthru
        _
      // Predicated region
      $region37: #{encoder_forward.1} parent=11 // pred_check
        %p312 = pneg %p190
      $region38: #{encoder_forward.1} parent=11 // pred_check_branch
        %314 = sbr.rel (%p312) target = $region40
      $region39: #{encoder_forward.1} parent=11 // pred_region
        _
      $region40: #{encoder_forward.1} parent=11 // pred_fallthru
        _
      // Predicated region
      $region41: #{encoder_forward.1} parent=11 // pred_check
        %p315 = pneg %p211
      $region42: #{encoder_forward.1} parent=11 // pred_check_branch
        %317 = sbr.rel (%p315) target = $region44
      $region43: #{encoder_forward.1} parent=11 // pred_region
        _
      $region44: #{encoder_forward.1} parent=11 // pred_fallthru
        _
      // Predicated region
      $region45: #{encoder_forward.1} parent=11 // pred_check
        %p318 = pneg %p232
      $region46: #{encoder_forward.1} parent=11 // pred_check_branch
        %320 = sbr.rel (%p318) target = $region48
      $region47: #{encoder_forward.1} parent=11 // pred_region
        _
      $region48: #{encoder_forward.1} parent=11 // pred_fallthru
        _
      // Predicated region
      $region49: #{encoder_forward.1} parent=11 // pred_check
        %p321 = pneg %p253
      $region50: #{encoder_forward.1} parent=11 // pred_check_branch
        %323 = sbr.rel (%p321) target = $region52
      $region51: #{encoder_forward.1} parent=11 // pred_region
        _
      $region52: #{encoder_forward.1} parent=11 // pred_fallthru
        _
    $region12: #{encoder_forward.1} parent=5 // pred_fallthru
      _
    %p324 = scmp.lt.s32.totalorder %s17, 2
    // Predicated region
    $region53: #{encoder_forward.1} parent=5 // pred_check
      %p325 = pneg %p324
    $region54: #{encoder_forward.1} parent=5 // pred_check_branch
      %327 = sbr.rel (%p325) target = $region56
    $region55: #{encoder_forward.1} parent=5 // pred_region
      // Predicated region
      $region57: #{encoder_forward.1} parent=55 // pred_check
        %p328 = pneg %p37
      $region58: #{encoder_forward.1} parent=55 // pred_check_branch
        %330 = sbr.rel (%p328) target = $region60
      $region59: #{encoder_forward.1} parent=55 // pred_region
        %p331 = scmp.lt.s32.totalorder %s17, 1
        %s332 = scalar_select %p331, %s17, 1
        %s333 = smul.addr %s332, 4
        %s334 = smul.addr %s333, 8
        %s335 = scalar_lea.vmem %s0, %s334
      $region60: #{encoder_forward.1} parent=55 // pred_fallthru
        _
    $region56: #{encoder_forward.1} parent=5 // pred_fallthru
      _
    %p336 = scmp.le.s32.totalorder 1, %s17
    %p337 = scmp.lt.s32.totalorder %s17, 3
    %p338 = pnand %p336, %p337
    %p339 = pneg %p338
    // Predicated region
    $region61: #{encoder_forward.1} parent=5 // pred_check
      _
    $region62: #{encoder_forward.1} parent=5 // pred_check_branch
      %341 = sbr.rel (%p338) target = $region64
    $region63: #{encoder_forward.1} parent=5 // pred_region
      %s342 = ssub.s32 %s17, 1
      %p343 = scmp.lt.s32.totalorder %s22, 1
      %s344 = scalar_select %p343, %s22, 1
      %s345 = smul.addr %s344, 4
      %s346 = smul.addr %s345, 8
      %s347 = scalar_lea.vmem %s0, %s346
      %p348 = pneg %p43
      %p349 = pneg %p40
      %p350 = pneg %p64
      %p351 = pneg %p61
      %p352 = pneg %p85
      %p353 = pneg %p82
      %p354 = pneg %p106
      %p355 = pneg %p103
      %p356 = pneg %p127
      %p357 = pneg %p124
      %p358 = pneg %p148
      %p359 = pneg %p145
      %p360 = pneg %p169
      %p361 = pneg %p166
      %p362 = pneg %p190
      %p363 = pneg %p187
      %p364 = pneg %p211
      %p365 = pneg %p208
      %p366 = pneg %p232
      %p367 = pneg %p229
      %p368 = pneg %p253
      %p369 = pneg %p250
      %p370 = pneg %p279
      %p371 = pneg %p276
      %p372 = scmp.lt.s32.totalorder %s22, 1
      %s373 = scalar_select %p372, %s22, 1
      %s374 = smul.addr %s373, 4
      %s375 = scalar_lea.vmem %s11, %s374
      %p376 = scmp.lt.s32.totalorder %s22, 1
      %s377 = scalar_select %p376, %s22, 1
      %s378 = smul.addr %s377, 4
      %s379 = smul.addr %s378, 8
      %s380 = scalar_lea.vmem %s0, %s379
      %p381 = scmp.lt.s32.totalorder %s22, 1
      %s382 = scalar_select %p381, %s22, 1
      %s383 = smul.addr %s382, 4
      %s384 = scalar_lea.vmem %s11, %s383
      %v386 = vld [vmem:[%s380] sm:$0x1f]
      %s387 = scalar_lea.vmem %s380, 8
      %v388 = vld [vmem:[%s387] sm:$0x1f]
      %s389 = scalar_lea.vmem %s380, 16
      %v390 = vld [vmem:[%s389] sm:$0x1f]
      %s391 = scalar_lea.vmem %s380, 24
      %v392 = vld [vmem:[%s391] sm:$0x1f]
      %v393 = vpack.c.bf16 %v386, %v386
      %v394 = vpack.c.bf16 %v388, %v388
      %v395 = vpack.c.bf16 %v390, %v390
      %v396 = vpack.c.bf16 %v392, %v392
      %v397 = vld [vmem:[%s2] sm:$0x1]
      %v398 = vld [vmem:[%s1] sm:$0xf]
      %v399 = vld [vmem:[%s1 + $0x4] sm:$0xf]
      %v400 = vld [vmem:[%s1 + $0x8] sm:$0xf]
      %v401 = vld [vmem:[%s1 + $0xc] sm:$0xf]
      %v402 = vld [vmem:[%s1 + $0x10] sm:$0xf]
      %v403 = vld [vmem:[%s1 + $0x14] sm:$0xf]
      %v404 = vld [vmem:[%s1 + $0x18] sm:$0xf]
      %v405 = vld [vmem:[%s1 + $0x1c] sm:$0xf]
      %s406 = scalar_lea.vmem %s1, 32
      %v407 = vld [vmem:[%s406] sm:$0xf]
      %v408 = vld [vmem:[%s406 + $0x4] sm:$0xf]
      %v409 = vld [vmem:[%s406 + $0x8] sm:$0xf]
      %v410 = vld [vmem:[%s406 + $0xc] sm:$0xf]
      %v411 = vld [vmem:[%s406 + $0x10] sm:$0xf]
      %v412 = vld [vmem:[%s406 + $0x14] sm:$0xf]
      %v413 = vld [vmem:[%s406 + $0x18] sm:$0xf]
      %v414 = vld [vmem:[%s406 + $0x1c] sm:$0xf]
      %v423 = vunpack.c.l.b16 %v407
      %v424 = vunpack.c.l.b16 %v408
      %v425 = vunpack.c.l.b16 %v409
      %v426 = vunpack.c.l.b16 %v410
      %v427 = vunpack.c.l.b16 %v411
      %v428 = vunpack.c.l.b16 %v412
      %v429 = vunpack.c.l.b16 %v413
      %v430 = vunpack.c.l.b16 %v414
      %v431 = vpack.c.b16 %v424, %v423
      %v432 = vpack.c.b16 %v426, %v425
      %v433 = vpack.c.b16 %v428, %v427
      %v434 = vpack.c.b16 %v430, %v429
      %vm439 = vcmask 523264
      %v441 = vsel %vm439, %v394, 0
      %443 = vmatpush.bf16.msra.mxu0 0
      %444 = vmatpush.bf16.msra.mxu0 0
      %445 = vmatpush.bf16.msra.mxu0 0
      %446 = vmatpush.bf16.msra.mxu0 0
      %447 = vmatpush.bf16.msra.mxu0 %v434
      %448 = vmatpush.bf16.msra.mxu0 %v433
      %449 = vmatpush.bf16.msra.mxu0 %v432
      %450 = vmatpush.bf16.msra.mxu0 %v431
      %451 = vmatmul.bf16.gmra.mxu0 %v441
      %v452 = vpop.f32.mrf.mxu0
      %v453 = vadd.f32 0.0, %v452
      %v454 = vpop.f32.mrf.mxu0
      %455 = vdwg.mxu0
      %v464 = vunpack.c.l.b16 %v398
      %v465 = vunpack.c.l.b16 %v399
      %v466 = vunpack.c.l.b16 %v400
      %v467 = vunpack.c.l.b16 %v401
      %v468 = vunpack.c.l.b16 %v402
      %v469 = vunpack.c.l.b16 %v403
      %v470 = vunpack.c.l.b16 %v404
      %v471 = vunpack.c.l.b16 %v405
      %v472 = vpack.c.b16 %v465, %v464
      %v473 = vpack.c.b16 %v467, %v466
      %v474 = vpack.c.b16 %v469, %v468
      %v475 = vpack.c.b16 %v471, %v470
      %v481 = vsel %vm439, %v393, 0
      %483 = vmatpush.bf16.msra.mxu0 0
      %484 = vmatpush.bf16.msra.mxu0 0
      %485 = vmatpush.bf16.msra.mxu0 0
      %486 = vmatpush.bf16.msra.mxu0 0
      %487 = vmatpush.bf16.msra.mxu0 %v475
      %488 = vmatpush.bf16.msra.mxu0 %v474
      %489 = vmatpush.bf16.msra.mxu0 %v473
      %490 = vmatpush.bf16.msra.mxu0 %v472
      %491 = vmatmul.bf16.gmra.mxu0 %v481
      %v492 = vpop.f32.mrf.mxu0
      %v493 = vadd.f32 %v453, %v492
      %v494 = vpop.f32.mrf.mxu0
      %495 = vdwg.mxu0
      %s496 = scalar_lea.vmem %s1, 64
      %v497 = vld [vmem:[%s496] sm:$0xf]
      %v498 = vld [vmem:[%s496 + $0x4] sm:$0xf]
      %v499 = vld [vmem:[%s496 + $0x8] sm:$0xf]
      %v500 = vld [vmem:[%s496 + $0xc] sm:$0xf]
      %v501 = vld [vmem:[%s496 + $0x10] sm:$0xf]
      %v502 = vld [vmem:[%s496 + $0x14] sm:$0xf]
      %v503 = vld [vmem:[%s496 + $0x18] sm:$0xf]
      %v504 = vld [vmem:[%s496 + $0x1c] sm:$0xf]
      %v513 = vunpack.c.l.b16 %v497
      %v514 = vunpack.c.l.b16 %v498
      %v515 = vunpack.c.l.b16 %v499
      %v516 = vunpack.c.l.b16 %v500
      %v517 = vunpack.c.l.b16 %v501
      %v518 = vunpack.c.l.b16 %v502
      %v519 = vunpack.c.l.b16 %v503
      %v520 = vunpack.c.l.b16 %v504
      %v521 = vpack.c.b16 %v514, %v513
      %v522 = vpack.c.b16 %v516, %v515
      %v523 = vpack.c.b16 %v518, %v517
      %v524 = vpack.c.b16 %v520, %v519
      %v530 = vsel %vm439, %v395, 0
      %532 = vmatpush.bf16.msra.mxu0 0
      %533 = vmatpush.bf16.msra.mxu0 0
      %534 = vmatpush.bf16.msra.mxu0 0
      %535 = vmatpush.bf16.msra.mxu0 0
      %536 = vmatpush.bf16.msra.mxu0 %v524
      %537 = vmatpush.bf16.msra.mxu0 %v523
      %538 = vmatpush.bf16.msra.mxu0 %v522
      %539 = vmatpush.bf16.msra.mxu0 %v521
      %540 = vmatmul.bf16.gmra.mxu0 %v530
      %v541 = vpop.f32.mrf.mxu0
      %v542 = vadd.f32 0.0, %v541
      %v543 = vpop.f32.mrf.mxu0
      %544 = vdwg.mxu0
      %v545 = vadd.f32 %v493, %v542
      %s546 = scalar_lea.vmem %s1, 96
      %v547 = vld [vmem:[%s546] sm:$0xf]
      %v548 = vld [vmem:[%s546 + $0x4] sm:$0xf]
      %v549 = vld [vmem:[%s546 + $0x8] sm:$0xf]
      %v550 = vld [vmem:[%s546 + $0xc] sm:$0xf]
      %v551 = vld [vmem:[%s546 + $0x10] sm:$0xf]
      %v552 = vld [vmem:[%s546 + $0x14] sm:$0xf]
      %v553 = vld [vmem:[%s546 + $0x18] sm:$0xf]
      %v554 = vld [vmem:[%s546 + $0x1c] sm:$0xf]
      %v563 = vunpack.c.l.b16 %v547
      %v564 = vunpack.c.l.b16 %v548
      %v565 = vunpack.c.l.b16 %v549
      %v566 = vunpack.c.l.b16 %v550
      %v567 = vunpack.c.l.b16 %v551
      %v568 = vunpack.c.l.b16 %v552
      %v569 = vunpack.c.l.b16 %v553
      %v570 = vunpack.c.l.b16 %v554
      %v571 = vpack.c.b16 %v564, %v563
      %v572 = vpack.c.b16 %v566, %v565
      %v573 = vpack.c.b16 %v568, %v567
      %v574 = vpack.c.b16 %v570, %v569
      %v580 = vsel %vm439, %v396, 0
      %582 = vmatpush.bf16.msra.mxu0 0
      %583 = vmatpush.bf16.msra.mxu0 0
      %584 = vmatpush.bf16.msra.mxu0 0
      %585 = vmatpush.bf16.msra.mxu0 0
      %586 = vmatpush.bf16.msra.mxu0 %v574
      %587 = vmatpush.bf16.msra.mxu0 %v573
      %588 = vmatpush.bf16.msra.mxu0 %v572
      %589 = vmatpush.bf16.msra.mxu0 %v571
      %590 = vmatmul.bf16.gmra.mxu0 %v580
      %v591 = vpop.f32.mrf.mxu0
      %v592 = vadd.f32 0.0, %v591
      %v593 = vpop.f32.mrf.mxu0
      %594 = vdwg.mxu0
      %v595 = vadd.f32 %v545, %v592
      %v597 = vperm.slane %v397, 0
      %v599 = vadd.f32 %v595, %v597
      %600 = vmatpush.bf16.msra.mxu0 0
      %601 = vmatpush.bf16.msra.mxu0 0
      %602 = vmatpush.bf16.msra.mxu0 0
      %603 = vmatpush.bf16.msra.mxu0 0
      %604 = vmatpush.bf16.msra.mxu0 %v434
      %605 = vmatpush.bf16.msra.mxu0 %v433
      %606 = vmatpush.bf16.msra.mxu0 %v432
      %607 = vmatpush.bf16.msra.mxu0 %v431
      %608 = vmatmul.bf16.gmra.mxu0 %v580
      %v609 = vpop.f32.mrf.mxu0
      %v610 = vadd.f32 0.0, %v609
      %v611 = vpop.f32.mrf.mxu0
      %612 = vdwg.mxu0
      %613 = vmatpush.bf16.msra.mxu0 0
      %614 = vmatpush.bf16.msra.mxu0 0
      %615 = vmatpush.bf16.msra.mxu0 0
      %616 = vmatpush.bf16.msra.mxu0 0
      %617 = vmatpush.bf16.msra.mxu0 %v475
      %618 = vmatpush.bf16.msra.mxu0 %v474
      %619 = vmatpush.bf16.msra.mxu0 %v473
      %620 = vmatpush.bf16.msra.mxu0 %v472
      %621 = vmatmul.bf16.gmra.mxu0 %v530
      %v622 = vpop.f32.mrf.mxu0
      %v623 = vadd.f32 %v610, %v622
      %v624 = vpop.f32.mrf.mxu0
      %625 = vdwg.mxu0
      %v626 = vshrl.u32 %v393, 16
      %v628 = vshll.u32 %v393, 16
      %v630 = vrot.slane %v628, 1
      %v631 = vor.u32 %v626, %v630
      %v633 = vsel %vm439, %v631, 0
      %635 = vmatpush.bf16.msra.mxu0 0
      %636 = vmatpush.bf16.msra.mxu0 0
      %637 = vmatpush.bf16.msra.mxu0 0
      %638 = vmatpush.bf16.msra.mxu0 0
      %639 = vmatpush.bf16.msra.mxu0 %v524
      %640 = vmatpush.bf16.msra.mxu0 %v523
      %641 = vmatpush.bf16.msra.mxu0 %v522
      %642 = vmatpush.bf16.msra.mxu0 %v521
      %643 = vmatmul.bf16.gmra.mxu0 %v633
      %v644 = vpop.f32.mrf.mxu0
      %v645 = vadd.f32 0.0, %v644
      %v646 = vpop.f32.mrf.mxu0
      %647 = vdwg.mxu0
      %v648 = vadd.f32 %v623, %v645
      %v649 = vshrl.u32 %v394, 16
      %v651 = vshll.u32 %v394, 16
      %v653 = vrot.slane %v651, 1
      %v654 = vor.u32 %v649, %v653
      %v656 = vsel %vm439, %v654, 0
      %658 = vmatpush.bf16.msra.mxu0 0
      %659 = vmatpush.bf16.msra.mxu0 0
      %660 = vmatpush.bf16.msra.mxu0 0
      %661 = vmatpush.bf16.msra.mxu0 0
      %662 = vmatpush.bf16.msra.mxu0 %v574
      %663 = vmatpush.bf16.msra.mxu0 %v573
      %664 = vmatpush.bf16.msra.mxu0 %v572
      %665 = vmatpush.bf16.msra.mxu0 %v571
      %666 = vmatmul.bf16.gmra.mxu0 %v656
      %v667 = vpop.f32.mrf.mxu0
      %v668 = vadd.f32 0.0, %v667
      %v669 = vpop.f32.mrf.mxu0
      %670 = vdwg.mxu0
      %v671 = vadd.f32 %v648, %v668
      %v672 = vadd.f32 %v671, %v597
      %v673 = vmax.f32 %v599, 0.0
      %v674 = vpack.c.bf16 %v673, %v673
      %v675 = vmax.f32 %v672, 0.0
      %v676 = vpack.c.bf16 %v675, %v675
      %v677 = vlaneseq
      %v678 = vshrl.u32 %v677, 7
      %v679 = vlaneseq
      %v680 = vand.u32 %v679, 127
      %v681 = vsub.s32 %v678, 1
      %vm682 = vcmp.eq.s32.totalorder %v680, %v681
      %v683 = vsel %vm682, 1.0, 0.0
      %v684 = vpack.c.bf16 %v683, %v683
      %vm685 = vcmask 31744
      %v687 = vsel %vm685, %v684, 0
      %vm689 = vcmask 1041408
      %v691 = vsel %vm689, %v676, 0
      %693 = vmatpush.bf16.msra.mxu0 0
      %694 = vmatpush.bf16.msra.mxu0 0
      %695 = vmatpush.bf16.msra.mxu0 0
      %696 = vmatpush.bf16.msra.mxu0 0
      %697 = vmatpush.bf16.msra.mxu0 0
      %698 = vmatpush.bf16.msra.mxu0 0
      %699 = vmatpush.bf16.msra.mxu0 0
      %700 = vmatpush.bf16.msra.mxu0 %v691
      %701 = vmatmul.bf16.gmra.mxu0 %v687
      %v702 = vpop.f32.mrf.mxu0
      %v703 = vadd.f32 0.0, %v702
      %v704 = vpop.f32.mrf.mxu0
      %705 = vdwg.mxu0
      %v706 = vpack.c.bf16 %v703, %v703
      %v707 = vld [vmem:[%s3] sm:$0xf]
      %v708 = vld [vmem:[%s3 + $0x4] sm:$0xf]
      %v709 = vld [vmem:[%s3 + $0x8] sm:$0xf]
      %v710 = vld [vmem:[%s3 + $0xc] sm:$0xf]
      %v711 = vld [vmem:[%s3 + $0x10] sm:$0xf]
      %v712 = vld [vmem:[%s3 + $0x14] sm:$0xf]
      %v713 = vld [vmem:[%s3 + $0x18] sm:$0xf]
      %v714 = vld [vmem:[%s3 + $0x1c] sm:$0xf]
      %v715 = vld [vmem:[%s3 + $0x20] sm:$0xf]
      %v716 = vld [vmem:[%s3 + $0x24] sm:$0xf]
      %v717 = vld [vmem:[%s3 + $0x28] sm:$0xf]
      %v718 = vld [vmem:[%s3 + $0x2c] sm:$0xf]
      %v719 = vld [vmem:[%s3 + $0x30] sm:$0xf]
      %v720 = vld [vmem:[%s3 + $0x34] sm:$0xf]
      %v721 = vld [vmem:[%s3 + $0x38] sm:$0xf]
      %v722 = vld [vmem:[%s3 + $0x3c] sm:$0xf]
      %s723 = scalar_lea.vmem %s3, 64
      %v724 = vld [vmem:[%s723] sm:$0xf]
      %v725 = vld [vmem:[%s723 + $0x4] sm:$0xf]
      %v726 = vld [vmem:[%s723 + $0x8] sm:$0xf]
      %v727 = vld [vmem:[%s723 + $0xc] sm:$0xf]
      %v728 = vld [vmem:[%s723 + $0x10] sm:$0xf]
      %v729 = vld [vmem:[%s723 + $0x14] sm:$0xf]
      %v730 = vld [vmem:[%s723 + $0x18] sm:$0xf]
      %v731 = vld [vmem:[%s723 + $0x1c] sm:$0xf]
      %v732 = vld [vmem:[%s723 + $0x20] sm:$0xf]
      %v733 = vld [vmem:[%s723 + $0x24] sm:$0xf]
      %v734 = vld [vmem:[%s723 + $0x28] sm:$0xf]
      %v735 = vld [vmem:[%s723 + $0x2c] sm:$0xf]
      %v736 = vld [vmem:[%s723 + $0x30] sm:$0xf]
      %v737 = vld [vmem:[%s723 + $0x34] sm:$0xf]
      %v738 = vld [vmem:[%s723 + $0x38] sm:$0xf]
      %v739 = vld [vmem:[%s723 + $0x3c] sm:$0xf]
      %v756 = vunpack.c.l.b16 %v724
      %v757 = vunpack.c.l.b16 %v725
      %v758 = vunpack.c.l.b16 %v726
      %v759 = vunpack.c.l.b16 %v727
      %v760 = vunpack.c.l.b16 %v728
      %v761 = vunpack.c.l.b16 %v729
      %v762 = vunpack.c.l.b16 %v730
      %v763 = vunpack.c.l.b16 %v731
      %v764 = vunpack.c.l.b16 %v732
      %v765 = vunpack.c.l.b16 %v733
      %v766 = vunpack.c.l.b16 %v734
      %v767 = vunpack.c.l.b16 %v735
      %v768 = vunpack.c.l.b16 %v736
      %v769 = vunpack.c.l.b16 %v737
      %v770 = vunpack.c.l.b16 %v738
      %v771 = vunpack.c.l.b16 %v739
      %v772 = vpack.c.b16 %v757, %v756
      %v773 = vpack.c.b16 %v759, %v758
      %v774 = vpack.c.b16 %v761, %v760
      %v775 = vpack.c.b16 %v763, %v762
      %v776 = vpack.c.b16 %v765, %v764
      %v777 = vpack.c.b16 %v767, %v766
      %v778 = vpack.c.b16 %v769, %v768
      %v779 = vpack.c.b16 %v771, %v770
      %788 = vmatpush.bf16.msra.mxu0 %v779
      %789 = vmatpush.bf16.msra.mxu0 %v778
      %790 = vmatpush.bf16.msra.mxu0 %v777
      %791 = vmatpush.bf16.msra.mxu0 %v776
      %792 = vmatpush.bf16.msra.mxu0 %v775
      %793 = vmatpush.bf16.msra.mxu0 %v774
      %794 = vmatpush.bf16.msra.mxu0 %v773
      %795 = vmatpush.bf16.msra.mxu0 %v772
      %796 = vmatmul.bf16.gmra.mxu0 %v674
      %v797 = vpop.f32.mrf.mxu0
      %v798 = vadd.f32 0.0, %v797
      %v799 = vpop.f32.mrf.mxu0
      %800 = vdwg.mxu0
      %v817 = vunpack.c.l.b16 %v707
      %v818 = vunpack.c.l.b16 %v708
      %v819 = vunpack.c.l.b16 %v709
      %v820 = vunpack.c.l.b16 %v710
      %v821 = vunpack.c.l.b16 %v711
      %v822 = vunpack.c.l.b16 %v712
      %v823 = vunpack.c.l.b16 %v713
      %v824 = vunpack.c.l.b16 %v714
      %v825 = vunpack.c.l.b16 %v715
      %v826 = vunpack.c.l.b16 %v716
      %v827 = vunpack.c.l.b16 %v717
      %v828 = vunpack.c.l.b16 %v718
      %v829 = vunpack.c.l.b16 %v719
      %v830 = vunpack.c.l.b16 %v720
      %v831 = vunpack.c.l.b16 %v721
      %v832 = vunpack.c.l.b16 %v722
      %v833 = vpack.c.b16 %v818, %v817
      %v834 = vpack.c.b16 %v820, %v819
      %v835 = vpack.c.b16 %v822, %v821
      %v836 = vpack.c.b16 %v824, %v823
      %v837 = vpack.c.b16 %v826, %v825
      %v838 = vpack.c.b16 %v828, %v827
      %v839 = vpack.c.b16 %v830, %v829
      %v840 = vpack.c.b16 %v832, %v831
      %849 = vmatpush.bf16.msra.mxu0 %v840
      %850 = vmatpush.bf16.msra.mxu0 %v839
      %851 = vmatpush.bf16.msra.mxu0 %v838
      %852 = vmatpush.bf16.msra.mxu0 %v837
      %853 = vmatpush.bf16.msra.mxu0 %v836
      %854 = vmatpush.bf16.msra.mxu0 %v835
      %855 = vmatpush.bf16.msra.mxu0 %v834
      %856 = vmatpush.bf16.msra.mxu0 %v833
      %857 = vmatmul.bf16.gmra.mxu0 %v706
      %v858 = vpop.f32.mrf.mxu0
      %v859 = vadd.f32 %v798, %v858
      %v860 = vpop.f32.mrf.mxu0
      %861 = vdwg.mxu0
      %s862 = scalar_lea.vmem %s3, 128
      %v863 = vld [vmem:[%s862] sm:$0xf]
      %v864 = vld [vmem:[%s862 + $0x4] sm:$0xf]
      %v865 = vld [vmem:[%s862 + $0x8] sm:$0xf]
      %v866 = vld [vmem:[%s862 + $0xc] sm:$0xf]
      %v867 = vld [vmem:[%s862 + $0x10] sm:$0xf]
      %v868 = vld [vmem:[%s862 + $0x14] sm:$0xf]
      %v869 = vld [vmem:[%s862 + $0x18] sm:$0xf]
      %v870 = vld [vmem:[%s862 + $0x1c] sm:$0xf]
      %v871 = vld [vmem:[%s862 + $0x20] sm:$0xf]
      %v872 = vld [vmem:[%s862 + $0x24] sm:$0xf]
      %v873 = vld [vmem:[%s862 + $0x28] sm:$0xf]
      %v874 = vld [vmem:[%s862 + $0x2c] sm:$0xf]
      %v875 = vld [vmem:[%s862 + $0x30] sm:$0xf]
      %v876 = vld [vmem:[%s862 + $0x34] sm:$0xf]
      %v877 = vld [vmem:[%s862 + $0x38] sm:$0xf]
      %v878 = vld [vmem:[%s862 + $0x3c] sm:$0xf]
      %v895 = vunpack.c.l.b16 %v863
      %v896 = vunpack.c.l.b16 %v864
      %v897 = vunpack.c.l.b16 %v865
      %v898 = vunpack.c.l.b16 %v866
      %v899 = vunpack.c.l.b16 %v867
      %v900 = vunpack.c.l.b16 %v868
      %v901 = vunpack.c.l.b16 %v869
      %v902 = vunpack.c.l.b16 %v870
      %v903 = vunpack.c.l.b16 %v871
      %v904 = vunpack.c.l.b16 %v872
      %v905 = vunpack.c.l.b16 %v873
      %v906 = vunpack.c.l.b16 %v874
      %v907 = vunpack.c.l.b16 %v875
      %v908 = vunpack.c.l.b16 %v876
      %v909 = vunpack.c.l.b16 %v877
      %v910 = vunpack.c.l.b16 %v878
      %v911 = vpack.c.b16 %v896, %v895
      %v912 = vpack.c.b16 %v898, %v897
      %v913 = vpack.c.b16 %v900, %v899
      %v914 = vpack.c.b16 %v902, %v901
      %v915 = vpack.c.b16 %v904, %v903
      %v916 = vpack.c.b16 %v906, %v905
      %v917 = vpack.c.b16 %v908, %v907
      %v918 = vpack.c.b16 %v910, %v909
      %927 = vmatpush.bf16.msra.mxu0 %v918
      %928 = vmatpush.bf16.msra.mxu0 %v917
      %929 = vmatpush.bf16.msra.mxu0 %v916
      %930 = vmatpush.bf16.msra.mxu0 %v915
      %931 = vmatpush.bf16.msra.mxu0 %v914
      %932 = vmatpush.bf16.msra.mxu0 %v913
      %933 = vmatpush.bf16.msra.mxu0 %v912
      %934 = vmatpush.bf16.msra.mxu0 %v911
      %935 = vmatmul.bf16.gmra.mxu0 %v676
      %v936 = vpop.f32.mrf.mxu0
      %v937 = vadd.f32 0.0, %v936
      %v938 = vpop.f32.mrf.mxu0
      %939 = vdwg.mxu0
      %v940 = vadd.f32 %v859, %v937
      %v941 = vsub.s32 %v678, 4294967295
      %vm942 = vcmp.eq.s32.totalorder %v680, %v941
      %v943 = vsel %vm942, 1.0, 0.0
      %v944 = vpack.c.bf16 %v943, %v943
      %v946 = vsel %vm685, %v944, 0
      %v949 = vsel %vm689, %v674, 0
      %951 = vmatpush.bf16.msra.mxu0 0
      %952 = vmatpush.bf16.msra.mxu0 0
      %953 = vmatpush.bf16.msra.mxu0 0
      %954 = vmatpush.bf16.msra.mxu0 0
      %955 = vmatpush.bf16.msra.mxu0 0
      %956 = vmatpush.bf16.msra.mxu0 0
      %957 = vmatpush.bf16.msra.mxu0 0
      %958 = vmatpush.bf16.msra.mxu0 %v949
      %959 = vmatmul.bf16.gmra.mxu0 %v946
      %v960 = vpop.f32.mrf.mxu0
      %v961 = vadd.f32 0.0, %v960
      %v962 = vpop.f32.mrf.mxu0
      %963 = vdwg.mxu0
      %v964 = vpack.c.bf16 %v961, %v961
      %s965 = scalar_lea.vmem %s3, 192
      %v966 = vld [vmem:[%s965] sm:$0xf]
      %v967 = vld [vmem:[%s965 + $0x4] sm:$0xf]
      %v968 = vld [vmem:[%s965 + $0x8] sm:$0xf]
      %v969 = vld [vmem:[%s965 + $0xc] sm:$0xf]
      %v970 = vld [vmem:[%s965 + $0x10] sm:$0xf]
      %v971 = vld [vmem:[%s965 + $0x14] sm:$0xf]
      %v972 = vld [vmem:[%s965 + $0x18] sm:$0xf]
      %v973 = vld [vmem:[%s965 + $0x1c] sm:$0xf]
      %v974 = vld [vmem:[%s965 + $0x20] sm:$0xf]
      %v975 = vld [vmem:[%s965 + $0x24] sm:$0xf]
      %v976 = vld [vmem:[%s965 + $0x28] sm:$0xf]
      %v977 = vld [vmem:[%s965 + $0x2c] sm:$0xf]
      %v978 = vld [vmem:[%s965 + $0x30] sm:$0xf]
      %v979 = vld [vmem:[%s965 + $0x34] sm:$0xf]
      %v980 = vld [vmem:[%s965 + $0x38] sm:$0xf]
      %v981 = vld [vmem:[%s965 + $0x3c] sm:$0xf]
      %v998 = vunpack.c.l.b16 %v966
      %v999 = vunpack.c.l.b16 %v967
      %v1000 = vunpack.c.l.b16 %v968
      %v1001 = vunpack.c.l.b16 %v969
      %v1002 = vunpack.c.l.b16 %v970
      %v1003 = vunpack.c.l.b16 %v971
      %v1004 = vunpack.c.l.b16 %v972
      %v1005 = vunpack.c.l.b16 %v973
      %v1006 = vunpack.c.l.b16 %v974
      %v1007 = vunpack.c.l.b16 %v975
      %v1008 = vunpack.c.l.b16 %v976
      %v1009 = vunpack.c.l.b16 %v977
      %v1010 = vunpack.c.l.b16 %v978
      %v1011 = vunpack.c.l.b16 %v979
      %v1012 = vunpack.c.l.b16 %v980
      %v1013 = vunpack.c.l.b16 %v981
      %v1014 = vpack.c.b16 %v999, %v998
      %v1015 = vpack.c.b16 %v1001, %v1000
      %v1016 = vpack.c.b16 %v1003, %v1002
      %v1017 = vpack.c.b16 %v1005, %v1004
      %v1018 = vpack.c.b16 %v1007, %v1006
      %v1019 = vpack.c.b16 %v1009, %v1008
      %v1020 = vpack.c.b16 %v1011, %v1010
      %v1021 = vpack.c.b16 %v1013, %v1012
      %1030 = vmatpush.bf16.msra.mxu0 %v1021
      %1031 = vmatpush.bf16.msra.mxu0 %v1020
      %1032 = vmatpush.bf16.msra.mxu0 %v1019
      %1033 = vmatpush.bf16.msra.mxu0 %v1018
      %1034 = vmatpush.bf16.msra.mxu0 %v1017
      %1035 = vmatpush.bf16.msra.mxu0 %v1016
      %1036 = vmatpush.bf16.msra.mxu0 %v1015
      %1037 = vmatpush.bf16.msra.mxu0 %v1014
      %1038 = vmatmul.bf16.gmra.mxu0 %v964
      %v1039 = vpop.f32.mrf.mxu0
      %v1040 = vadd.f32 0.0, %v1039
      %v1041 = vpop.f32.mrf.mxu0
      %1042 = vdwg.mxu0
      %v1043 = vadd.f32 %v940, %v1040
      %v1044 = vld [vmem:[%s4] sm:$0x1]
      %v1046 = vperm.slane %v1044, 0
      %v1048 = vadd.f32 %v1043, %v1046
      %v1049 = vmax.f32 %v1048, 0.0
      %v1050 = vpack.c.bf16 %v1049, %v1049
      %v1052 = vsel %vm689, %v1050, 0
      %1054 = vmatpush.bf16.msra.mxu0 0
      %1055 = vmatpush.bf16.msra.mxu0 0
      %1056 = vmatpush.bf16.msra.mxu0 0
      %1057 = vmatpush.bf16.msra.mxu0 0
      %1058 = vmatpush.bf16.msra.mxu0 0
      %1059 = vmatpush.bf16.msra.mxu0 0
      %1060 = vmatpush.bf16.msra.mxu0 0
      %1061 = vmatpush.bf16.msra.mxu0 %v1052
      %1062 = vmatmul.bf16.gmra.mxu0 %v687
      %v1063 = vpop.f32.mrf.mxu0
      %v1064 = vadd.f32 0.0, %v1063
      %v1065 = vpop.f32.mrf.mxu0
      %1066 = vdwg.mxu0
      %v1067 = vpack.c.bf16 %v1064, %v1064
      %v1068 = vld [vmem:[%s5] sm:$0xf]
      %v1069 = vld [vmem:[%s5 + $0x4] sm:$0xf]
      %v1070 = vld [vmem:[%s5 + $0x8] sm:$0xf]
      %v1071 = vld [vmem:[%s5 + $0xc] sm:$0xf]
      %v1072 = vld [vmem:[%s5 + $0x10] sm:$0xf]
      %v1073 = vld [vmem:[%s5 + $0x14] sm:$0xf]
      %v1074 = vld [vmem:[%s5 + $0x18] sm:$0xf]
      %v1075 = vld [vmem:[%s5 + $0x1c] sm:$0xf]
      %v1076 = vld [vmem:[%s5 + $0x20] sm:$0xf]
      %v1077 = vld [vmem:[%s5 + $0x24] sm:$0xf]
      %v1078 = vld [vmem:[%s5 + $0x28] sm:$0xf]
      %v1079 = vld [vmem:[%s5 + $0x2c] sm:$0xf]
      %v1080 = vld [vmem:[%s5 + $0x30] sm:$0xf]
      %v1081 = vld [vmem:[%s5 + $0x34] sm:$0xf]
      %v1082 = vld [vmem:[%s5 + $0x38] sm:$0xf]
      %v1083 = vld [vmem:[%s5 + $0x3c] sm:$0xf]
      %s1084 = scalar_lea.vmem %s5, 64
      %v1085 = vld [vmem:[%s1084] sm:$0xf]
      %v1086 = vld [vmem:[%s1084 + $0x4] sm:$0xf]
      %v1087 = vld [vmem:[%s1084 + $0x8] sm:$0xf]
      %v1088 = vld [vmem:[%s1084 + $0xc] sm:$0xf]
      %v1089 = vld [vmem:[%s1084 + $0x10] sm:$0xf]
      %v1090 = vld [vmem:[%s1084 + $0x14] sm:$0xf]
      %v1091 = vld [vmem:[%s1084 + $0x18] sm:$0xf]
      %v1092 = vld [vmem:[%s1084 + $0x1c] sm:$0xf]
      %v1093 = vld [vmem:[%s1084 + $0x20] sm:$0xf]
      %v1094 = vld [vmem:[%s1084 + $0x24] sm:$0xf]
      %v1095 = vld [vmem:[%s1084 + $0x28] sm:$0xf]
      %v1096 = vld [vmem:[%s1084 + $0x2c] sm:$0xf]
      %v1097 = vld [vmem:[%s1084 + $0x30] sm:$0xf]
      %v1098 = vld [vmem:[%s1084 + $0x34] sm:$0xf]
      %v1099 = vld [vmem:[%s1084 + $0x38] sm:$0xf]
      %v1100 = vld [vmem:[%s1084 + $0x3c] sm:$0xf]
      %v1117 = vunpack.c.l.b16 %v1085
      %v1118 = vunpack.c.l.b16 %v1086
      %v1119 = vunpack.c.l.b16 %v1087
      %v1120 = vunpack.c.l.b16 %v1088
      %v1121 = vunpack.c.l.b16 %v1089
      %v1122 = vunpack.c.l.b16 %v1090
      %v1123 = vunpack.c.l.b16 %v1091
      %v1124 = vunpack.c.l.b16 %v1092
      %v1125 = vunpack.c.l.b16 %v1093
      %v1126 = vunpack.c.l.b16 %v1094
      %v1127 = vunpack.c.l.b16 %v1095
      %v1128 = vunpack.c.l.b16 %v1096
      %v1129 = vunpack.c.l.b16 %v1097
      %v1130 = vunpack.c.l.b16 %v1098
      %v1131 = vunpack.c.l.b16 %v1099
      %v1132 = vunpack.c.l.b16 %v1100
      %v1133 = vpack.c.b16 %v1118, %v1117
      %v1134 = vpack.c.b16 %v1120, %v1119
      %v1135 = vpack.c.b16 %v1122, %v1121
      %v1136 = vpack.c.b16 %v1124, %v1123
      %v1137 = vpack.c.b16 %v1126, %v1125
      %v1138 = vpack.c.b16 %v1128, %v1127
      %v1139 = vpack.c.b16 %v1130, %v1129
      %v1140 = vpack.c.b16 %v1132, %v1131
      %1149 = vmatpush.bf16.msra.mxu0 %v1140
      %1150 = vmatpush.bf16.msra.mxu0 %v1139
      %1151 = vmatpush.bf16.msra.mxu0 %v1138
      %1152 = vmatpush.bf16.msra.mxu0 %v1137
      %1153 = vmatpush.bf16.msra.mxu0 %v1136
      %1154 = vmatpush.bf16.msra.mxu0 %v1135
      %1155 = vmatpush.bf16.msra.mxu0 %v1134
      %1156 = vmatpush.bf16.msra.mxu0 %v1133
      %1157 = vmatmul.bf16.gmra.mxu0 %v1050
      %v1158 = vpop.f32.mrf.mxu0
      %v1159 = vadd.f32 0.0, %v1158
      %v1160 = vpop.f32.mrf.mxu0
      %1161 = vdwg.mxu0
      %v1178 = vunpack.c.l.b16 %v1068
      %v1179 = vunpack.c.l.b16 %v1069
      %v1180 = vunpack.c.l.b16 %v1070
      %v1181 = vunpack.c.l.b16 %v1071
      %v1182 = vunpack.c.l.b16 %v1072
      %v1183 = vunpack.c.l.b16 %v1073
      %v1184 = vunpack.c.l.b16 %v1074
      %v1185 = vunpack.c.l.b16 %v1075
      %v1186 = vunpack.c.l.b16 %v1076
      %v1187 = vunpack.c.l.b16 %v1077
      %v1188 = vunpack.c.l.b16 %v1078
      %v1189 = vunpack.c.l.b16 %v1079
      %v1190 = vunpack.c.l.b16 %v1080
      %v1191 = vunpack.c.l.b16 %v1081
      %v1192 = vunpack.c.l.b16 %v1082
      %v1193 = vunpack.c.l.b16 %v1083
      %v1194 = vpack.c.b16 %v1179, %v1178
      %v1195 = vpack.c.b16 %v1181, %v1180
      %v1196 = vpack.c.b16 %v1183, %v1182
      %v1197 = vpack.c.b16 %v1185, %v1184
      %v1198 = vpack.c.b16 %v1187, %v1186
      %v1199 = vpack.c.b16 %v1189, %v1188
      %v1200 = vpack.c.b16 %v1191, %v1190
      %v1201 = vpack.c.b16 %v1193, %v1192
      %1210 = vmatpush.bf16.msra.mxu0 %v1201
      %1211 = vmatpush.bf16.msra.mxu0 %v1200
      %1212 = vmatpush.bf16.msra.mxu0 %v1199
      %1213 = vmatpush.bf16.msra.mxu0 %v1198
      %1214 = vmatpush.bf16.msra.mxu0 %v1197
      %1215 = vmatpush.bf16.msra.mxu0 %v1196
      %1216 = vmatpush.bf16.msra.mxu0 %v1195
      %1217 = vmatpush.bf16.msra.mxu0 %v1194
      %1218 = vmatmul.bf16.gmra.mxu0 %v1067
      %v1219 = vpop.f32.mrf.mxu0
      %v1220 = vadd.f32 %v1159, %v1219
      %v1221 = vpop.f32.mrf.mxu0
      %1222 = vdwg.mxu0
      %1223 = vmatpush.bf16.msra.mxu0 0
      %1224 = vmatpush.bf16.msra.mxu0 0
      %1225 = vmatpush.bf16.msra.mxu0 0
      %1226 = vmatpush.bf16.msra.mxu0 0
      %1227 = vmatpush.bf16.msra.mxu0 0
      %1228 = vmatpush.bf16.msra.mxu0 0
      %1229 = vmatpush.bf16.msra.mxu0 0
      %1230 = vmatpush.bf16.msra.mxu0 %v1052
      %1231 = vmatmul.bf16.gmra.mxu0 %v946
      %v1232 = vpop.f32.mrf.mxu0
      %v1233 = vadd.f32 0.0, %v1232
      %v1234 = vpop.f32.mrf.mxu0
      %1235 = vdwg.mxu0
      %v1236 = vpack.c.bf16 %v1233, %v1233
      %s1237 = scalar_lea.vmem %s5, 128
      %v1238 = vld [vmem:[%s1237] sm:$0xf]
      %v1239 = vld [vmem:[%s1237 + $0x4] sm:$0xf]
      %v1240 = vld [vmem:[%s1237 + $0x8] sm:$0xf]
      %v1241 = vld [vmem:[%s1237 + $0xc] sm:$0xf]
      %v1242 = vld [vmem:[%s1237 + $0x10] sm:$0xf]
      %v1243 = vld [vmem:[%s1237 + $0x14] sm:$0xf]
      %v1244 = vld [vmem:[%s1237 + $0x18] sm:$0xf]
      %v1245 = vld [vmem:[%s1237 + $0x1c] sm:$0xf]
      %v1246 = vld [vmem:[%s1237 + $0x20] sm:$0xf]
      %v1247 = vld [vmem:[%s1237 + $0x24] sm:$0xf]
      %v1248 = vld [vmem:[%s1237 + $0x28] sm:$0xf]
      %v1249 = vld [vmem:[%s1237 + $0x2c] sm:$0xf]
      %v1250 = vld [vmem:[%s1237 + $0x30] sm:$0xf]
      %v1251 = vld [vmem:[%s1237 + $0x34] sm:$0xf]
      %v1252 = vld [vmem:[%s1237 + $0x38] sm:$0xf]
      %v1253 = vld [vmem:[%s1237 + $0x3c] sm:$0xf]
      %v1270 = vunpack.c.l.b16 %v1238
      %v1271 = vunpack.c.l.b16 %v1239
      %v1272 = vunpack.c.l.b16 %v1240
      %v1273 = vunpack.c.l.b16 %v1241
      %v1274 = vunpack.c.l.b16 %v1242
      %v1275 = vunpack.c.l.b16 %v1243
      %v1276 = vunpack.c.l.b16 %v1244
      %v1277 = vunpack.c.l.b16 %v1245
      %v1278 = vunpack.c.l.b16 %v1246
      %v1279 = vunpack.c.l.b16 %v1247
      %v1280 = vunpack.c.l.b16 %v1248
      %v1281 = vunpack.c.l.b16 %v1249
      %v1282 = vunpack.c.l.b16 %v1250
      %v1283 = vunpack.c.l.b16 %v1251
      %v1284 = vunpack.c.l.b16 %v1252
      %v1285 = vunpack.c.l.b16 %v1253
      %v1286 = vpack.c.b16 %v1271, %v1270
      %v1287 = vpack.c.b16 %v1273, %v1272
      %v1288 = vpack.c.b16 %v1275, %v1274
      %v1289 = vpack.c.b16 %v1277, %v1276
      %v1290 = vpack.c.b16 %v1279, %v1278
      %v1291 = vpack.c.b16 %v1281, %v1280
      %v1292 = vpack.c.b16 %v1283, %v1282
      %v1293 = vpack.c.b16 %v1285, %v1284
      %1302 = vmatpush.bf16.msra.mxu0 %v1293
      %1303 = vmatpush.bf16.msra.mxu0 %v1292
      %1304 = vmatpush.bf16.msra.mxu0 %v1291
      %1305 = vmatpush.bf16.msra.mxu0 %v1290
      %1306 = vmatpush.bf16.msra.mxu0 %v1289
      %1307 = vmatpush.bf16.msra.mxu0 %v1288
      %1308 = vmatpush.bf16.msra.mxu0 %v1287
      %1309 = vmatpush.bf16.msra.mxu0 %v1286
      %1310 = vmatmul.bf16.gmra.mxu0 %v1236
      %v1311 = vpop.f32.mrf.mxu0
      %v1312 = vadd.f32 0.0, %v1311
      %v1313 = vpop.f32.mrf.mxu0
      %1314 = vdwg.mxu0
      %v1315 = vadd.f32 %v1220, %v1312
      %v1316 = vld [vmem:[%s6] sm:$0x1]
      %v1318 = vperm.slane %v1316, 0
      %v1320 = vadd.f32 %v1315, %v1318
      %v1321 = vmax.f32 %v1320, 0.0
      %v1322 = vpack.c.bf16 %v1321, %v1321
      %v1324 = vsel %vm689, %v1322, 0
      %1326 = vmatpush.bf16.msra.mxu0 0
      %1327 = vmatpush.bf16.msra.mxu0 0
      %1328 = vmatpush.bf16.msra.mxu0 0
      %1329 = vmatpush.bf16.msra.mxu0 0
      %1330 = vmatpush.bf16.msra.mxu0 0
      %1331 = vmatpush.bf16.msra.mxu0 0
      %1332 = vmatpush.bf16.msra.mxu0 0
      %1333 = vmatpush.bf16.msra.mxu0 %v1324
      %1334 = vmatmul.bf16.gmra.mxu0 %v687
      %v1335 = vpop.f32.mrf.mxu0
      %v1336 = vadd.f32 0.0, %v1335
      %v1337 = vpop.f32.mrf.mxu0
      %1338 = vdwg.mxu0
      %v1339 = vpack.c.bf16 %v1336, %v1336
      %v1340 = vld [vmem:[%s7] sm:$0xf]
      %v1341 = vld [vmem:[%s7 + $0x4] sm:$0xf]
      %v1342 = vld [vmem:[%s7 + $0x8] sm:$0xf]
      %v1343 = vld [vmem:[%s7 + $0xc] sm:$0xf]
      %v1344 = vld [vmem:[%s7 + $0x10] sm:$0xf]
      %v1345 = vld [vmem:[%s7 + $0x14] sm:$0xf]
      %v1346 = vld [vmem:[%s7 + $0x18] sm:$0xf]
      %v1347 = vld [vmem:[%s7 + $0x1c] sm:$0xf]
      %v1348 = vld [vmem:[%s7 + $0x20] sm:$0xf]
      %v1349 = vld [vmem:[%s7 + $0x24] sm:$0xf]
      %v1350 = vld [vmem:[%s7 + $0x28] sm:$0xf]
      %v1351 = vld [vmem:[%s7 + $0x2c] sm:$0xf]
      %v1352 = vld [vmem:[%s7 + $0x30] sm:$0xf]
      %v1353 = vld [vmem:[%s7 + $0x34] sm:$0xf]
      %v1354 = vld [vmem:[%s7 + $0x38] sm:$0xf]
      %v1355 = vld [vmem:[%s7 + $0x3c] sm:$0xf]
      %s1356 = scalar_lea.vmem %s7, 64
      %v1357 = vld [vmem:[%s1356] sm:$0xf]
      %v1358 = vld [vmem:[%s1356 + $0x4] sm:$0xf]
      %v1359 = vld [vmem:[%s1356 + $0x8] sm:$0xf]
      %v1360 = vld [vmem:[%s1356 + $0xc] sm:$0xf]
      %v1361 = vld [vmem:[%s1356 + $0x10] sm:$0xf]
      %v1362 = vld [vmem:[%s1356 + $0x14] sm:$0xf]
      %v1363 = vld [vmem:[%s1356 + $0x18] sm:$0xf]
      %v1364 = vld [vmem:[%s1356 + $0x1c] sm:$0xf]
      %v1365 = vld [vmem:[%s1356 + $0x20] sm:$0xf]
      %v1366 = vld [vmem:[%s1356 + $0x24] sm:$0xf]
      %v1367 = vld [vmem:[%s1356 + $0x28] sm:$0xf]
      %v1368 = vld [vmem:[%s1356 + $0x2c] sm:$0xf]
      %v1369 = vld [vmem:[%s1356 + $0x30] sm:$0xf]
      %v1370 = vld [vmem:[%s1356 + $0x34] sm:$0xf]
      %v1371 = vld [vmem:[%s1356 + $0x38] sm:$0xf]
      %v1372 = vld [vmem:[%s1356 + $0x3c] sm:$0xf]
      %v1389 = vunpack.c.l.b16 %v1357
      %v1390 = vunpack.c.l.b16 %v1358
      %v1391 = vunpack.c.l.b16 %v1359
      %v1392 = vunpack.c.l.b16 %v1360
      %v1393 = vunpack.c.l.b16 %v1361
      %v1394 = vunpack.c.l.b16 %v1362
      %v1395 = vunpack.c.l.b16 %v1363
      %v1396 = vunpack.c.l.b16 %v1364
      %v1397 = vunpack.c.l.b16 %v1365
      %v1398 = vunpack.c.l.b16 %v1366
      %v1399 = vunpack.c.l.b16 %v1367
      %v1400 = vunpack.c.l.b16 %v1368
      %v1401 = vunpack.c.l.b16 %v1369
      %v1402 = vunpack.c.l.b16 %v1370
      %v1403 = vunpack.c.l.b16 %v1371
      %v1404 = vunpack.c.l.b16 %v1372
      %v1405 = vpack.c.b16 %v1390, %v1389
      %v1406 = vpack.c.b16 %v1392, %v1391
      %v1407 = vpack.c.b16 %v1394, %v1393
      %v1408 = vpack.c.b16 %v1396, %v1395
      %v1409 = vpack.c.b16 %v1398, %v1397
      %v1410 = vpack.c.b16 %v1400, %v1399
      %v1411 = vpack.c.b16 %v1402, %v1401
      %v1412 = vpack.c.b16 %v1404, %v1403
      %1421 = vmatpush.bf16.msra.mxu0 %v1412
      %1422 = vmatpush.bf16.msra.mxu0 %v1411
      %1423 = vmatpush.bf16.msra.mxu0 %v1410
      %1424 = vmatpush.bf16.msra.mxu0 %v1409
      %1425 = vmatpush.bf16.msra.mxu0 %v1408
      %1426 = vmatpush.bf16.msra.mxu0 %v1407
      %1427 = vmatpush.bf16.msra.mxu0 %v1406
      %1428 = vmatpush.bf16.msra.mxu0 %v1405
      %1429 = vmatmul.bf16.gmra.mxu0 %v1322
      %v1430 = vpop.f32.mrf.mxu0
      %v1431 = vadd.f32 0.0, %v1430
      %v1432 = vpop.f32.mrf.mxu0
      %1433 = vdwg.mxu0
      %v1450 = vunpack.c.l.b16 %v1340
      %v1451 = vunpack.c.l.b16 %v1341
      %v1452 = vunpack.c.l.b16 %v1342
      %v1453 = vunpack.c.l.b16 %v1343
      %v1454 = vunpack.c.l.b16 %v1344
      %v1455 = vunpack.c.l.b16 %v1345
      %v1456 = vunpack.c.l.b16 %v1346
      %v1457 = vunpack.c.l.b16 %v1347
      %v1458 = vunpack.c.l.b16 %v1348
      %v1459 = vunpack.c.l.b16 %v1349
      %v1460 = vunpack.c.l.b16 %v1350
      %v1461 = vunpack.c.l.b16 %v1351
      %v1462 = vunpack.c.l.b16 %v1352
      %v1463 = vunpack.c.l.b16 %v1353
      %v1464 = vunpack.c.l.b16 %v1354
      %v1465 = vunpack.c.l.b16 %v1355
      %v1466 = vpack.c.b16 %v1451, %v1450
      %v1467 = vpack.c.b16 %v1453, %v1452
      %v1468 = vpack.c.b16 %v1455, %v1454
      %v1469 = vpack.c.b16 %v1457, %v1456
      %v1470 = vpack.c.b16 %v1459, %v1458
      %v1471 = vpack.c.b16 %v1461, %v1460
      %v1472 = vpack.c.b16 %v1463, %v1462
      %v1473 = vpack.c.b16 %v1465, %v1464
      %1482 = vmatpush.bf16.msra.mxu0 %v1473
      %1483 = vmatpush.bf16.msra.mxu0 %v1472
      %1484 = vmatpush.bf16.msra.mxu0 %v1471
      %1485 = vmatpush.bf16.msra.mxu0 %v1470
      %1486 = vmatpush.bf16.msra.mxu0 %v1469
      %1487 = vmatpush.bf16.msra.mxu0 %v1468
      %1488 = vmatpush.bf16.msra.mxu0 %v1467
      %1489 = vmatpush.bf16.msra.mxu0 %v1466
      %1490 = vmatmul.bf16.gmra.mxu0 %v1339
      %v1491 = vpop.f32.mrf.mxu0
      %v1492 = vadd.f32 %v1431, %v1491
      %v1493 = vpop.f32.mrf.mxu0
      %1494 = vdwg.mxu0
      %1495 = vmatpush.bf16.msra.mxu0 0
      %1496 = vmatpush.bf16.msra.mxu0 0
      %1497 = vmatpush.bf16.msra.mxu0 0
      %1498 = vmatpush.bf16.msra.mxu0 0
      %1499 = vmatpush.bf16.msra.mxu0 0
      %1500 = vmatpush.bf16.msra.mxu0 0
      %1501 = vmatpush.bf16.msra.mxu0 0
      %1502 = vmatpush.bf16.msra.mxu0 %v1324
      %1503 = vmatmul.bf16.gmra.mxu0 %v946
      %v1504 = vpop.f32.mrf.mxu0
      %v1505 = vadd.f32 0.0, %v1504
      %v1506 = vpop.f32.mrf.mxu0
      %1507 = vdwg.mxu0
      %v1508 = vpack.c.bf16 %v1505, %v1505
      %s1509 = scalar_lea.vmem %s7, 128
      %v1510 = vld [vmem:[%s1509] sm:$0xf]
      %v1511 = vld [vmem:[%s1509 + $0x4] sm:$0xf]
      %v1512 = vld [vmem:[%s1509 + $0x8] sm:$0xf]
      %v1513 = vld [vmem:[%s1509 + $0xc] sm:$0xf]
      %v1514 = vld [vmem:[%s1509 + $0x10] sm:$0xf]
      %v1515 = vld [vmem:[%s1509 + $0x14] sm:$0xf]
      %v1516 = vld [vmem:[%s1509 + $0x18] sm:$0xf]
      %v1517 = vld [vmem:[%s1509 + $0x1c] sm:$0xf]
      %v1518 = vld [vmem:[%s1509 + $0x20] sm:$0xf]
      %v1519 = vld [vmem:[%s1509 + $0x24] sm:$0xf]
      %v1520 = vld [vmem:[%s1509 + $0x28] sm:$0xf]
      %v1521 = vld [vmem:[%s1509 + $0x2c] sm:$0xf]
      %v1522 = vld [vmem:[%s1509 + $0x30] sm:$0xf]
      %v1523 = vld [vmem:[%s1509 + $0x34] sm:$0xf]
      %v1524 = vld [vmem:[%s1509 + $0x38] sm:$0xf]
      %v1525 = vld [vmem:[%s1509 + $0x3c] sm:$0xf]
      %v1542 = vunpack.c.l.b16 %v1510
      %v1543 = vunpack.c.l.b16 %v1511
      %v1544 = vunpack.c.l.b16 %v1512
      %v1545 = vunpack.c.l.b16 %v1513
      %v1546 = vunpack.c.l.b16 %v1514
      %v1547 = vunpack.c.l.b16 %v1515
      %v1548 = vunpack.c.l.b16 %v1516
      %v1549 = vunpack.c.l.b16 %v1517
      %v1550 = vunpack.c.l.b16 %v1518
      %v1551 = vunpack.c.l.b16 %v1519
      %v1552 = vunpack.c.l.b16 %v1520
      %v1553 = vunpack.c.l.b16 %v1521
      %v1554 = vunpack.c.l.b16 %v1522
      %v1555 = vunpack.c.l.b16 %v1523
      %v1556 = vunpack.c.l.b16 %v1524
      %v1557 = vunpack.c.l.b16 %v1525
      %v1558 = vpack.c.b16 %v1543, %v1542
      %v1559 = vpack.c.b16 %v1545, %v1544
      %v1560 = vpack.c.b16 %v1547, %v1546
      %v1561 = vpack.c.b16 %v1549, %v1548
      %v1562 = vpack.c.b16 %v1551, %v1550
      %v1563 = vpack.c.b16 %v1553, %v1552
      %v1564 = vpack.c.b16 %v1555, %v1554
      %v1565 = vpack.c.b16 %v1557, %v1556
      %1574 = vmatpush.bf16.msra.mxu0 %v1565
      %1575 = vmatpush.bf16.msra.mxu0 %v1564
      %1576 = vmatpush.bf16.msra.mxu0 %v1563
      %1577 = vmatpush.bf16.msra.mxu0 %v1562
      %1578 = vmatpush.bf16.msra.mxu0 %v1561
      %1579 = vmatpush.bf16.msra.mxu0 %v1560
      %1580 = vmatpush.bf16.msra.mxu0 %v1559
      %1581 = vmatpush.bf16.msra.mxu0 %v1558
      %1582 = vmatmul.bf16.gmra.mxu0 %v1508
      %v1583 = vpop.f32.mrf.mxu0
      %v1584 = vadd.f32 0.0, %v1583
      %v1585 = vpop.f32.mrf.mxu0
      %1586 = vdwg.mxu0
      %v1587 = vadd.f32 %v1492, %v1584
      %v1588 = vld [vmem:[%s8] sm:$0x1]
      %v1590 = vperm.slane %v1588, 0
      %v1592 = vadd.f32 %v1587, %v1590
      %v1593 = vmax.f32 %v1592, 0.0
      %v1594 = vpack.c.bf16 %v1593, %v1593
      %v1595 = vld [vmem:[%s9] sm:$0xf]
      %v1596 = vld [vmem:[%s9 + $0x4] sm:$0xf]
      %v1597 = vld [vmem:[%s9 + $0x8] sm:$0xf]
      %v1598 = vld [vmem:[%s9 + $0xc] sm:$0xf]
      %v1603 = vunpack.c.l.b16 %v1595
      %v1604 = vunpack.c.l.b16 %v1596
      %v1605 = vunpack.c.l.b16 %v1597
      %v1606 = vunpack.c.l.b16 %v1598
      %v1607 = vpack.c.b16 %v1604, %v1603
      %v1608 = vpack.c.b16 %v1606, %v1605
      %vm1611 = vcmask 261120
      %v1613 = vsel %vm1611, %v1594, 0
      %1615 = vmatpush.bf16.msra.mxu0 0
      %1616 = vmatpush.bf16.msra.mxu0 0
      %1617 = vmatpush.bf16.msra.mxu0 0
      %1618 = vmatpush.bf16.msra.mxu0 0
      %1619 = vmatpush.bf16.msra.mxu0 0
      %1620 = vmatpush.bf16.msra.mxu0 0
      %1621 = vmatpush.bf16.msra.mxu0 %v1608
      %1622 = vmatpush.bf16.msra.mxu0 %v1607
      %1623 = vmatmul.bf16.gmra.mxu0 %v1613
      %v1624 = vpop.f32.mrf.mxu0
      %v1625 = vadd.f32 0.0, %v1624
      %v1626 = vpop.f32.mrf.mxu0
      %1627 = vdwg.mxu0
      %v1628 = vadd.f32 %v1320, %v1625
      %v1629 = vld [vmem:[%s10] sm:$0x1]
      %v1631 = vperm.slane %v1629, 0
      %v1633 = vadd.f32 %v1628, %v1631
      %v1634 = vmax.f32 %v1633, 0.0
      %v1635 = vpack.c.bf16 %v1634, %v1634
      %v1637 = vsel %vm689, %v1635, 0
      %1639 = vmatpush.bf16.msra.mxu0 0
      %1640 = vmatpush.bf16.msra.mxu0 0
      %1641 = vmatpush.bf16.msra.mxu0 0
      %1642 = vmatpush.bf16.msra.mxu0 0
      %1643 = vmatpush.bf16.msra.mxu0 0
      %1644 = vmatpush.bf16.msra.mxu0 0
      %1645 = vmatpush.bf16.msra.mxu0 0
      %1646 = vmatpush.bf16.msra.mxu0 %v1637
      %1647 = vmatmul.bf16.gmra.mxu0 %v687
      %v1648 = vpop.f32.mrf.mxu0
      %v1649 = vadd.f32 0.0, %v1648
      %v1650 = vpop.f32.mrf.mxu0
      %1651 = vdwg.mxu0
      %v1652 = vpack.c.bf16 %v1649, %v1649
      %s1653 = scalar_lea.vmem %s7, 192
      %v1654 = vld [vmem:[%s1653] sm:$0xf]
      %v1655 = vld [vmem:[%s1653 + $0x4] sm:$0xf]
      %v1656 = vld [vmem:[%s1653 + $0x8] sm:$0xf]
      %v1657 = vld [vmem:[%s1653 + $0xc] sm:$0xf]
      %v1658 = vld [vmem:[%s1653 + $0x10] sm:$0xf]
      %v1659 = vld [vmem:[%s1653 + $0x14] sm:$0xf]
      %v1660 = vld [vmem:[%s1653 + $0x18] sm:$0xf]
      %v1661 = vld [vmem:[%s1653 + $0x1c] sm:$0xf]
      %v1662 = vld [vmem:[%s1653 + $0x20] sm:$0xf]
      %v1663 = vld [vmem:[%s1653 + $0x24] sm:$0xf]
      %v1664 = vld [vmem:[%s1653 + $0x28] sm:$0xf]
      %v1665 = vld [vmem:[%s1653 + $0x2c] sm:$0xf]
      %v1666 = vld [vmem:[%s1653 + $0x30] sm:$0xf]
      %v1667 = vld [vmem:[%s1653 + $0x34] sm:$0xf]
      %v1668 = vld [vmem:[%s1653 + $0x38] sm:$0xf]
      %v1669 = vld [vmem:[%s1653 + $0x3c] sm:$0xf]
      %s1670 = scalar_lea.vmem %s7, 256
      %v1671 = vld [vmem:[%s1670] sm:$0xf]
      %v1672 = vld [vmem:[%s1670 + $0x4] sm:$0xf]
      %v1673 = vld [vmem:[%s1670 + $0x8] sm:$0xf]
      %v1674 = vld [vmem:[%s1670 + $0xc] sm:$0xf]
      %v1675 = vld [vmem:[%s1670 + $0x10] sm:$0xf]
      %v1676 = vld [vmem:[%s1670 + $0x14] sm:$0xf]
      %v1677 = vld [vmem:[%s1670 + $0x18] sm:$0xf]
      %v1678 = vld [vmem:[%s1670 + $0x1c] sm:$0xf]
      %v1679 = vld [vmem:[%s1670 + $0x20] sm:$0xf]
      %v1680 = vld [vmem:[%s1670 + $0x24] sm:$0xf]
      %v1681 = vld [vmem:[%s1670 + $0x28] sm:$0xf]
      %v1682 = vld [vmem:[%s1670 + $0x2c] sm:$0xf]
      %v1683 = vld [vmem:[%s1670 + $0x30] sm:$0xf]
      %v1684 = vld [vmem:[%s1670 + $0x34] sm:$0xf]
      %v1685 = vld [vmem:[%s1670 + $0x38] sm:$0xf]
      %v1686 = vld [vmem:[%s1670 + $0x3c] sm:$0xf]
      %v1703 = vunpack.c.l.b16 %v1671
      %v1704 = vunpack.c.l.b16 %v1672
      %v1705 = vunpack.c.l.b16 %v1673
      %v1706 = vunpack.c.l.b16 %v1674
      %v1707 = vunpack.c.l.b16 %v1675
      %v1708 = vunpack.c.l.b16 %v1676
      %v1709 = vunpack.c.l.b16 %v1677
      %v1710 = vunpack.c.l.b16 %v1678
      %v1711 = vunpack.c.l.b16 %v1679
      %v1712 = vunpack.c.l.b16 %v1680
      %v1713 = vunpack.c.l.b16 %v1681
      %v1714 = vunpack.c.l.b16 %v1682
      %v1715 = vunpack.c.l.b16 %v1683
      %v1716 = vunpack.c.l.b16 %v1684
      %v1717 = vunpack.c.l.b16 %v1685
      %v1718 = vunpack.c.l.b16 %v1686
      %v1719 = vpack.c.b16 %v1704, %v1703
      %v1720 = vpack.c.b16 %v1706, %v1705
      %v1721 = vpack.c.b16 %v1708, %v1707
      %v1722 = vpack.c.b16 %v1710, %v1709
      %v1723 = vpack.c.b16 %v1712, %v1711
      %v1724 = vpack.c.b16 %v1714, %v1713
      %v1725 = vpack.c.b16 %v1716, %v1715
      %v1726 = vpack.c.b16 %v1718, %v1717
      %1735 = vmatpush.bf16.msra.mxu0 %v1726
      %1736 = vmatpush.bf16.msra.mxu0 %v1725
      %1737 = vmatpush.bf16.msra.mxu0 %v1724
      %1738 = vmatpush.bf16.msra.mxu0 %v1723
      %1739 = vmatpush.bf16.msra.mxu0 %v1722
      %1740 = vmatpush.bf16.msra.mxu0 %v1721
      %1741 = vmatpush.bf16.msra.mxu0 %v1720
      %1742 = vmatpush.bf16.msra.mxu0 %v1719
      %1743 = vmatmul.bf16.gmra.mxu0 %v1635
      %v1744 = vpop.f32.mrf.mxu0
      %v1745 = vadd.f32 0.0, %v1744
      %v1746 = vpop.f32.mrf.mxu0
      %1747 = vdwg.mxu0
      %v1764 = vunpack.c.l.b16 %v1654
      %v1765 = vunpack.c.l.b16 %v1655
      %v1766 = vunpack.c.l.b16 %v1656
      %v1767 = vunpack.c.l.b16 %v1657
      %v1768 = vunpack.c.l.b16 %v1658
      %v1769 = vunpack.c.l.b16 %v1659
      %v1770 = vunpack.c.l.b16 %v1660
      %v1771 = vunpack.c.l.b16 %v1661
      %v1772 = vunpack.c.l.b16 %v1662
      %v1773 = vunpack.c.l.b16 %v1663
      %v1774 = vunpack.c.l.b16 %v1664
      %v1775 = vunpack.c.l.b16 %v1665
      %v1776 = vunpack.c.l.b16 %v1666
      %v1777 = vunpack.c.l.b16 %v1667
      %v1778 = vunpack.c.l.b16 %v1668
      %v1779 = vunpack.c.l.b16 %v1669
      %v1780 = vpack.c.b16 %v1765, %v1764
      %v1781 = vpack.c.b16 %v1767, %v1766
      %v1782 = vpack.c.b16 %v1769, %v1768
      %v1783 = vpack.c.b16 %v1771, %v1770
      %v1784 = vpack.c.b16 %v1773, %v1772
      %v1785 = vpack.c.b16 %v1775, %v1774
      %v1786 = vpack.c.b16 %v1777, %v1776
      %v1787 = vpack.c.b16 %v1779, %v1778
      %1796 = vmatpush.bf16.msra.mxu0 %v1787
      %1797 = vmatpush.bf16.msra.mxu0 %v1786
      %1798 = vmatpush.bf16.msra.mxu0 %v1785
      %1799 = vmatpush.bf16.msra.mxu0 %v1784
      %1800 = vmatpush.bf16.msra.mxu0 %v1783
      %1801 = vmatpush.bf16.msra.mxu0 %v1782
      %1802 = vmatpush.bf16.msra.mxu0 %v1781
      %1803 = vmatpush.bf16.msra.mxu0 %v1780
      %1804 = vmatmul.bf16.gmra.mxu0 %v1652
      %v1805 = vpop.f32.mrf.mxu0
      %v1806 = vadd.f32 %v1745, %v1805
      %v1807 = vpop.f32.mrf.mxu0
      %1808 = vdwg.mxu0
      %1809 = vmatpush.bf16.msra.mxu0 0
      %1810 = vmatpush.bf16.msra.mxu0 0
      %1811 = vmatpush.bf16.msra.mxu0 0
      %1812 = vmatpush.bf16.msra.mxu0 0
      %1813 = vmatpush.bf16.msra.mxu0 0
      %1814 = vmatpush.bf16.msra.mxu0 0
      %1815 = vmatpush.bf16.msra.mxu0 0
      %1816 = vmatpush.bf16.msra.mxu0 %v1637
      %1817 = vmatmul.bf16.gmra.mxu0 %v946
      %v1818 = vpop.f32.mrf.mxu0
      %v1819 = vadd.f32 0.0, %v1818
      %v1820 = vpop.f32.mrf.mxu0
      %1821 = vdwg.mxu0
      %v1822 = vpack.c.bf16 %v1819, %v1819
      %s1823 = scalar_lea.vmem %s7, 320
      %v1824 = vld [vmem:[%s1823] sm:$0xf]
      %v1825 = vld [vmem:[%s1823 + $0x4] sm:$0xf]
      %v1826 = vld [vmem:[%s1823 + $0x8] sm:$0xf]
      %v1827 = vld [vmem:[%s1823 + $0xc] sm:$0xf]
      %v1828 = vld [vmem:[%s1823 + $0x10] sm:$0xf]
      %v1829 = vld [vmem:[%s1823 + $0x14] sm:$0xf]
      %v1830 = vld [vmem:[%s1823 + $0x18] sm:$0xf]
      %v1831 = vld [vmem:[%s1823 + $0x1c] sm:$0xf]
      %v1832 = vld [vmem:[%s1823 + $0x20] sm:$0xf]
      %v1833 = vld [vmem:[%s1823 + $0x24] sm:$0xf]
      %v1834 = vld [vmem:[%s1823 + $0x28] sm:$0xf]
      %v1835 = vld [vmem:[%s1823 + $0x2c] sm:$0xf]
      %v1836 = vld [vmem:[%s1823 + $0x30] sm:$0xf]
      %v1837 = vld [vmem:[%s1823 + $0x34] sm:$0xf]
      %v1838 = vld [vmem:[%s1823 + $0x38] sm:$0xf]
      %v1839 = vld [vmem:[%s1823 + $0x3c] sm:$0xf]
      %v1856 = vunpack.c.l.b16 %v1824
      %v1857 = vunpack.c.l.b16 %v1825
      %v1858 = vunpack.c.l.b16 %v1826
      %v1859 = vunpack.c.l.b16 %v1827
      %v1860 = vunpack.c.l.b16 %v1828
      %v1861 = vunpack.c.l.b16 %v1829
      %v1862 = vunpack.c.l.b16 %v1830
      %v1863 = vunpack.c.l.b16 %v1831
      %v1864 = vunpack.c.l.b16 %v1832
      %v1865 = vunpack.c.l.b16 %v1833
      %v1866 = vunpack.c.l.b16 %v1834
      %v1867 = vunpack.c.l.b16 %v1835
      %v1868 = vunpack.c.l.b16 %v1836
      %v1869 = vunpack.c.l.b16 %v1837
      %v1870 = vunpack.c.l.b16 %v1838
      %v1871 = vunpack.c.l.b16 %v1839
      %v1872 = vpack.c.b16 %v1857, %v1856
      %v1873 = vpack.c.b16 %v1859, %v1858
      %v1874 = vpack.c.b16 %v1861, %v1860
      %v1875 = vpack.c.b16 %v1863, %v1862
      %v1876 = vpack.c.b16 %v1865, %v1864
      %v1877 = vpack.c.b16 %v1867, %v1866
      %v1878 = vpack.c.b16 %v1869, %v1868
      %v1879 = vpack.c.b16 %v1871, %v1870
      %1888 = vmatpush.bf16.msra.mxu0 %v1879
      %1889 = vmatpush.bf16.msra.mxu0 %v1878
      %1890 = vmatpush.bf16.msra.mxu0 %v1877
      %1891 = vmatpush.bf16.msra.mxu0 %v1876
      %1892 = vmatpush.bf16.msra.mxu0 %v1875
      %1893 = vmatpush.bf16.msra.mxu0 %v1874
      %1894 = vmatpush.bf16.msra.mxu0 %v1873
      %1895 = vmatpush.bf16.msra.mxu0 %v1872
      %1896 = vmatmul.bf16.gmra.mxu0 %v1822
      %v1897 = vpop.f32.mrf.mxu0
      %v1898 = vadd.f32 0.0, %v1897
      %v1899 = vpop.f32.mrf.mxu0
      %1900 = vdwg.mxu0
      %v1901 = vadd.f32 %v1806, %v1898
      %s1902 = scalar_lea.vmem %s8, 1
      %v1903 = vld [vmem:[%s1902] sm:$0x1]
      %v1905 = vperm.slane %v1903, 0
      %v1907 = vadd.f32 %v1901, %v1905
      %v1908 = vmax.f32 %v1907, 0.0
      %v1909 = vpack.c.bf16 %v1908, %v1908
      %s1910 = scalar_lea.vmem %s9, 16
      %v1911 = vld [vmem:[%s1910] sm:$0xf]
      %v1912 = vld [vmem:[%s1910 + $0x4] sm:$0xf]
      %v1913 = vld [vmem:[%s1910 + $0x8] sm:$0xf]
      %v1914 = vld [vmem:[%s1910 + $0xc] sm:$0xf]
      %v1919 = vunpack.c.l.b16 %v1911
      %v1920 = vunpack.c.l.b16 %v1912
      %v1921 = vunpack.c.l.b16 %v1913
      %v1922 = vunpack.c.l.b16 %v1914
      %v1923 = vpack.c.b16 %v1920, %v1919
      %v1924 = vpack.c.b16 %v1922, %v1921
      %v1928 = vsel %vm1611, %v1909, 0
      %1930 = vmatpush.bf16.msra.mxu0 0
      %1931 = vmatpush.bf16.msra.mxu0 0
      %1932 = vmatpush.bf16.msra.mxu0 0
      %1933 = vmatpush.bf16.msra.mxu0 0
      %1934 = vmatpush.bf16.msra.mxu0 0
      %1935 = vmatpush.bf16.msra.mxu0 0
      %1936 = vmatpush.bf16.msra.mxu0 %v1924
      %1937 = vmatpush.bf16.msra.mxu0 %v1923
      %1938 = vmatmul.bf16.gmra.mxu0 %v1928
      %v1939 = vpop.f32.mrf.mxu0
      %v1940 = vadd.f32 0.0, %v1939
      %v1941 = vpop.f32.mrf.mxu0
      %1942 = vdwg.mxu0
      %v1943 = vadd.f32 %v1633, %v1940
      %s1944 = scalar_lea.vmem %s10, 1
      %v1945 = vld [vmem:[%s1944] sm:$0x1]
      %v1947 = vperm.slane %v1945, 0
      %v1949 = vadd.f32 %v1943, %v1947
      %v1950 = vmax.f32 %v1949, 0.0
      %1951 = vst [vmem:[%s384] sm:$0xf] %v1950
      %p1952 = scmp.lt.s32.totalorder %s22, 1
      %s1953 = scalar_select %p1952, %s22, 1
      %s1954 = smul.addr %s1953, 4
      %s1955 = scalar_lea.vmem %s11, %s1954
      // Predicated region
      $region65: #{encoder_forward.1} parent=63 // pred_check
        %p1956 = pneg %p276
      $region66: #{encoder_forward.1} parent=63 // pred_check_branch
        %1958 = sbr.rel (%p1956) target = $region68
      $region67: #{encoder_forward.1} parent=63 // pred_region
        _
      $region68: #{encoder_forward.1} parent=63 // pred_fallthru
        _
    $region64: #{encoder_forward.1} parent=5 // pred_fallthru
      _
    %p1959 = scmp.le.s32.totalorder 2, %s17
    // Predicated region
    $region69: #{encoder_forward.1} parent=5 // pred_check
      %p1960 = pneg %p1959
    $region70: #{encoder_forward.1} parent=5 // pred_check_branch
      %1962 = sbr.rel (%p1960) target = $region72
    $region71: #{encoder_forward.1} parent=5 // pred_region
      %s1963 = ssub.s32 %s17, 2
      // Predicated region
      $region73: #{encoder_forward.1} parent=71 // pred_check
        %p1964 = pneg %p282
      $region74: #{encoder_forward.1} parent=71 // pred_check_branch
        %1966 = sbr.rel (%p1964) target = $region76
      $region75: #{encoder_forward.1} parent=71 // pred_region
        %p1967 = scmp.lt.s32.totalorder %s23, 1
        %s1968 = scalar_select %p1967, %s23, 1
        %s1969 = smul.addr %s1968, 4
        %s1970 = scalar_lea.vmem %s11, %s1969
      $region76: #{encoder_forward.1} parent=71 // pred_fallthru
        _
    $region72: #{encoder_forward.1} parent=5 // pred_fallthru
      _
  $region6: #{encoder_forward.1} parent=0 // loop_footer
    %s21 = sadd.s32 1, %s17
  $region7: #{encoder_forward.1} parent=0 // loop_footer_branch
    %16 = sbr.rel target = $region3
  $region8: #{encoder_forward.1} parent=0 // loop_exit
    _

</llo_original>
